<compile_context>
chip_gen: v7x
topology: tpu7x:2x2x1
jax: 0.10.0
libtpu: 0.0.40
codegen_flags: <defaults>
</compile_context>

<pallas_src>
import functools
import math

import jax
import jax.numpy as jnp
from jax import lax
from jax.experimental import pallas as pl
from jax.experimental.pallas import tpu as pltpu

HP = 128            # one full vreg lane width = one gate slot
G3 = 3 * HP         # [r | z | n] lane-aligned gate block
SCORE_LANE = 64     # lane offset of the command scores in the packed output


# ----------------------------------------------------------------------------
# GRU gate math on 128-lane-aligned [r|z|n] slabs (valid lanes [0, H); padded
# lanes are exactly zero by construction, so they stay zero through the gates).
# PyTorch semantics: r=σ(gi_r+gh_r), z=σ(gi_z+gh_z), n=tanh(gi_n + r*gh_n),
# h' = (1-z)*n + z*h.
# ----------------------------------------------------------------------------
def _gru_gates(gi, gh, h):
    rz = jax.nn.sigmoid(gi[:, :2 * HP] + gh[:, :2 * HP])   # one EUP slab for r & z
    r = rz[:, :HP]
    z = rz[:, HP:]
    n = jnp.tanh(gi[:, 2 * HP:] + r * gh[:, 2 * HP:])
    return (1.0 - z) * n + z * h


# ----------------------------------------------------------------------------
# Fused forward kernel.
# ----------------------------------------------------------------------------
def _agent_kernel(ids_ref, carry_ref, table_ref, wh_ref, bias_ref, out_ref, *,
                  seq_obs, seq_cmd, batch, num_commands, hidden, rows_pad):
    B, C, H = batch, num_commands, hidden
    R = B + C
    RP = rows_pad
    T = max(seq_obs, seq_cmd)
    N = T * RP
    V2 = table_ref.shape[0]
    bf16 = jnp.bfloat16
    f32 = jnp.float32

    # ---- fused embedding gather + input projection + b_ih (review #5) -------
    # ids encode obs tokens in [0,V) and command tokens in [V,2V); the (2V,384)
    # table already holds emb @ W_ih^T + b_ih per GRU, so one matmul replaces
    # two gathers, two input projections and two bias adds.
    onehot = (ids_ref[...] ==
              lax.broadcasted_iota(jnp.int32, (N, V2), 1)
              ).astype(f32).astype(bf16)
    xg = jnp.dot(onehot, table_ref[...], preferred_element_type=f32)   # (N, 384)

    # ---- per-row constants for the fused obs/cmd recurrence ------------------
    row_r = lax.broadcasted_iota(jnp.int32, (RP, 1), 0)
    is_obs = row_r < B                                                 # (RP, 1)
    bh_rows = jnp.where(is_obs, bias_ref[0:1, :], bias_ref[1:2, :])    # (RP, 384)

    # ---- gru_state hidden-side matmul: independent of the recurrence, hoisted
    lane = lax.broadcasted_iota(jnp.int32, (B, HP), 1)
    h_prev = jnp.where(lane < H, carry_ref[...], 0.0)                  # carried hidden
    gh_s = (jnp.dot(h_prev.astype(bf16), wh_ref[:, 3 * G3:4 * G3],
                    preferred_element_type=f32) + bias_ref[3:4, :])

    # ---- fused gru_input + gru_command recurrence (review #4) ----------------
    # rows [0,B) = batch (obs) rows, [B,R) = command rows, padded to RP rows.
    # One (RP,128)x(128,768) MXU op per step covers BOTH GRUs: lanes [0,384)
    # use W_hh_obs, [384,768) use W_hh_cmd; a per-row VPU select picks the half.
    w_rec = wh_ref[:, 0:2 * G3]
    h = jnp.zeros((RP, HP), f32)
    for t in range(T):                       # static & small -> fully unrolled
        gi = xg[t * RP:(t + 1) * RP, :]
        ghh = jnp.dot(h.astype(bf16), w_rec, preferred_element_type=f32)
        gh = jnp.where(is_obs, ghh[:, :G3], ghh[:, G3:]) + bh_rows
        h_new = _gru_gates(gi, gh, h)
        if t < seq_obs and t < seq_cmd:
            h = h_new
        elif t < seq_obs:                    # only obs rows still running
            h = jnp.where(is_obs, h_new, h)
        else:                                # only cmd rows still running
            h = jnp.where(is_obs, h, h_new)
    h_enc = h[0:B, :]                        # final hidden of gru_input
    h_cmd = h[B:R, :]                        # final hidden of gru_command

    # ---- gru_state: single step over h_enc with the carried hidden ----------
    gi_s = (jnp.dot(h_enc.astype(bf16), wh_ref[:, 2 * G3:3 * G3],
                    preferred_element_type=f32) + bias_ref[2:3, :])
    h_state = _gru_gates(gi_s, gh_s, h_prev)          # (B, 128), pad lanes == 0

    # ---- heads ----------------------------------------------------------------
    # head cols: col 0 = state half of linear_command, col 1 = critic weight.
    sv = jnp.dot(h_state.astype(bf16), wh_ref[:, 4 * G3:4 * G3 + HP],
                 preferred_element_type=f32)
    value = sv[:, 1:2] + bias_ref[4:5, 1:2]                            # (B, 1)
    # command half: (1,H) . (C,H) contraction -> (1,C); tiny, epilogue-only.
    w_cc = bias_ref[5:6, 0:HP].astype(bf16)
    s_cmd = lax.dot_general(w_cc, h_cmd.astype(bf16),
                            dimension_numbers=(((1,), (1,)), ((), ())),
                            preferred_element_type=f32)                # (1, C)
    scores = jnp.maximum(sv[:, 0:1] + s_cmd + bias_ref[4:5, 0:1], 0.0)  # (B, C)

    # ---- single lane-dense packed output (review #2) --------------------------
    out_ref[...] = h_state                       # lanes [0,H): new hidden, rest 0
    out_ref[:, H:H + 1] = value                  # lane H: critic value
    out_ref[:, SCORE_LANE:SCORE_LANE + C] = scores


# ----------------------------------------------------------------------------
# Init: PyTorch-default-like uniform ranges; everything packed kernel-ready
# (gate-concatenated, 128-lane gate-padded, pre-transposed, bf16 matmul slabs).
# ----------------------------------------------------------------------------
def _gate_pad_cols(w, H):
    """(3H, in) torch GRU weight -> (in, 3*128); gate k in lanes [k*128, k*128+H)."""
    in_dim = w.shape[1]
    w3 = w.reshape(3, H, in_dim)
    wp = jnp.zeros((3, HP, in_dim), w.dtype).at[:, :H, :].set(w3)
    return wp.reshape(3 * HP, in_dim).T


def _gate_pad_bias(b, H):
    bp = jnp.zeros((3, HP), b.dtype).at[:, :H].set(b.reshape(3, H))
    return bp.reshape(1, 3 * HP)


def _row_pad(w):
    """(H, X) -> (128, X); zero rows beyond H kill padded / stale carry lanes."""
    return jnp.zeros((HP, w.shape[1]), w.dtype).at[:w.shape[0]].set(w)


def _init_gru_raw(key, in_dim, H):
    k = 1.0 / math.sqrt(H)
    k1, k2, k3, k4 = jax.random.split(key, 4)
    return (jax.random.uniform(k1, (3 * H, in_dim), jnp.float32, -k, k),   # w_ih
            jax.random.uniform(k2, (3 * H, H), jnp.float32, -k, k),        # w_hh
            jax.random.uniform(k3, (3 * H,), jnp.float32, -k, k),          # b_ih
            jax.random.uniform(k4, (3 * H,), jnp.float32, -k, k))          # b_hh


def init_agent_params(key, input_size, embedding_size, hidden_size):
    H = hidden_size
    keys = jax.random.split(key, 8)
    emb = jax.random.normal(keys[0], (input_size, embedding_size), jnp.float32)
    gru_o = _init_gru_raw(keys[1], embedding_size, H)
    gru_c = _init_gru_raw(keys[2], embedding_size, H)
    gru_s = _init_gru_raw(keys[3], H, H)
    kl, kl2 = 1.0 / math.sqrt(H), 1.0 / math.sqrt(2 * H)
    lin_w = jax.random.uniform(keys[4], (1, H), jnp.float32, -kl, kl)
    lin_b = jax.random.uniform(keys[5], (1,), jnp.float32, -kl, kl)
    cmd_w = jax.random.uniform(keys[6], (1, 2 * H), jnp.float32, -kl2, kl2)
    cmd_b = jax.random.uniform(keys[7], (1,), jnp.float32, -kl2, kl2)

    # (a) fused embedding + input-projection + b_ih table:
    #     rows [0,V) = obs GRU, rows [V,2V) = command GRU.
    table = jnp.concatenate(
        [emb @ _gate_pad_cols(gru_o[0], H) + _gate_pad_bias(gru_o[2], H),
         emb @ _gate_pad_cols(gru_c[0], H) + _gate_pad_bias(gru_c[2], H)],
        axis=0).astype(jnp.bfloat16)

    # (b) one hidden-side / head weight slab, 128-lane gate aligned:
    #     [0,384) W_hh_obs | [384,768) W_hh_cmd | [768,1152) W_ih_state |
    #     [1152,1536) W_hh_state | [1536,1664) head cols (0: cmd-state, 1: value)
    head = (jnp.zeros((HP, HP), jnp.float32)
            .at[:H, 0].set(cmd_w[0, :H])
            .at[:H, 1].set(lin_w[0, :]))
    wh_slab = jnp.concatenate(
        [_row_pad(_gate_pad_cols(gru_o[1], H)),
         _row_pad(_gate_pad_cols(gru_c[1], H)),
         _row_pad(_gate_pad_cols(gru_s[0], H)),
         _row_pad(_gate_pad_cols(gru_s[1], H)),
         head], axis=1).astype(jnp.bfloat16)

    # (c) one f32 bias / small-vector slab (VPU side).
    bias = (jnp.zeros((8, G3), jnp.float32)
            .at[0:1].set(_gate_pad_bias(gru_o[3], H))     # b_hh obs
            .at[1:2].set(_gate_pad_bias(gru_c[3], H))     # b_hh cmd
            .at[2:3].set(_gate_pad_bias(gru_s[2], H))     # b_ih state
            .at[3:4].set(_gate_pad_bias(gru_s[3], H))     # b_hh state
            .at[4, 0].set(cmd_b[0])                        # linear_command bias
            .at[4, 1].set(lin_b[0])                        # critic bias
            .at[5, :H].set(cmd_w[0, H:]))                  # cmd half of linear_command

    raw = dict(emb=emb, gru_input=gru_o, gru_command=gru_c, gru_state=gru_s,
               lin_w=lin_w, lin_b=lin_b, cmd_w=cmd_w, cmd_b=cmd_b)
    return dict(hidden_size=H, vocab=input_size, table=table,
                wh_slab=wh_slab, bias_slab=bias, raw=raw)


# ----------------------------------------------------------------------------
# Forward (mirrors AgentNetwork.forward).  `carry` is the packed (B,128) slab
# from the previous call (lanes [0,H) hold self.hidden_state); None == zeros.
# Returns (scores (1,B,C), index (1,B,1), value (1,B,1), new_carry (B,128)).
# ----------------------------------------------------------------------------
def agent_forward(params, observations, commands, rng_key, carry=None):
    H = params["hidden_size"]
    V = params["vocab"]
    seq_obs, batch = observations.shape
    seq_cmd, num_commands = commands.shape
    R = batch + num_commands
    RP = ((R + 7) // 8) * 8              # sublane-aligned rows per time step
    T = max(seq_obs, seq_cmd)
    assert H + 1 <= SCORE_LANE and SCORE_LANE + num_commands <= HP

    if carry is None:
        carry = jnp.zeros((batch, HP), jnp.float32)

    # Interleaved token ids, one RP-row block per time step:
    # [obs tokens | command tokens + V | pad]; the +V offset selects the
    # command half of the fused projection table inside the kernel.
    obs_p = jnp.zeros((T, batch), jnp.int32).at[:seq_obs].set(
        observations.astype(jnp.int32))
    cmd_p = jnp.zeros((T, num_commands), jnp.int32).at[:seq_cmd].set(
        commands.astype(jnp.int32) + V)
    ids = jnp.concatenate(
        [obs_p, cmd_p, jnp.zeros((T, RP - R), jnp.int32)], axis=1
    ).reshape(T * RP, 1)

    kernel = functools.partial(
        _agent_kernel, seq_obs=seq_obs, seq_cmd=seq_cmd, batch=batch,
        num_commands=num_commands, hidden=H, rows_pad=RP)
    vmem = pl.BlockSpec(memory_space=pltpu.MemorySpace.VMEM)

    out = pl.pallas_call(
        kernel,
        out_shape=jax.ShapeDtypeStruct((batch, HP), jnp.float32),
        in_specs=[vmem] * 5,
        out_specs=vmem,
        input_output_aliases={1: 0},     # carried hidden slab aliases the output
    )(ids, carry, params["table"], params["wh_slab"], params["bias_slab"])

    scores = out[:, SCORE_LANE:SCORE_LANE + num_commands]
    value = out[:, H:H + 1]
    # torch: softmax(scores) then multinomial == categorical on ReLU'd scores.
    idx = jax.random.categorical(rng_key, scores, axis=-1)
    index = idx.reshape(1, batch, 1).astype(jnp.int32)
    return scores[None], index, value[None], out


# ----------------------------------------------------------------------------
# Plain-JAX f32 reference (test-only) mirroring the torch module exactly.
# ----------------------------------------------------------------------------
def _ref_gru_cell(p, x, h):
    w_ih, w_hh, b_ih, b_hh = p
    H = h.shape[-1]
    gi = x @ w_ih.T + b_ih
    gh = h @ w_hh.T + b_hh
    r = jax.nn.sigmoid(gi[:, :H] + gh[:, :H])
    z = jax.nn.sigmoid(gi[:, H:2 * H] + gh[:, H:2 * H])
    n = jnp.tanh(gi[:, 2 * H:] + r * gh[:, 2 * H:])
    return (1.0 - z) * n + z * h


def _ref_forward(raw, observations, commands, hidden_state):
    emb = raw["emb"]
    H = hidden_state.shape[-1]
    B, C = observations.shape[1], commands.shape[1]
    h_enc = jnp.zeros((B, H), jnp.float32)
    for t in range(observations.shape[0]):
        h_enc = _ref_gru_cell(raw["gru_input"], emb[observations[t]], h_enc)
    h_cmd = jnp.zeros((C, H), jnp.float32)
    for t in range(commands.shape[0]):
        h_cmd = _ref_gru_cell(raw["gru_command"], emb[commands[t]], h_cmd)
    h_state = _ref_gru_cell(raw["gru_state"], h_enc, hidden_state)
    value = h_state @ raw["lin_w"].T + raw["lin_b"]
    s = (h_state @ raw["cmd_w"][:, :H].T
         + (h_cmd @ raw["cmd_w"][:, H:].T).T + raw["cmd_b"])
    return jnp.maximum(s, 0.0), value, h_state


if __name__ == "__main__":
    input_size = 50        # vocab
    embedding_size = 16
    hidden_size = 32
    seq_obs, batch = 6, 2
    seq_cmd, num_commands = 5, 4

    key = jax.random.PRNGKey(0)
    kp, ko, kc, ks1, ks2 = jax.random.split(key, 5)
    params = init_agent_params(kp, input_size, embedding_size, hidden_size)

    observations = jax.random.randint(ko, (seq_obs, batch), 0, input_size, jnp.int32)
    commands = jax.random.randint(kc, (seq_cmd, num_commands), 0, input_size, jnp.int32)

    # Two environment steps to exercise the carried-hidden path.
    carry = None
    ref_hidden = jnp.zeros((batch, hidden_size), jnp.float32)
    for step_key in (ks1, ks2):
        scores, index, value, carry = agent_forward(
            params, observations, commands, step_key, carry)
        jax.block_until_ready((scores, index, value, carry))

        assert scores.shape == (1, batch, num_commands)
        assert index.shape == (1, batch, 1)
        assert value.shape == (1, batch, 1)
        assert carry.shape == (batch, HP)

        # Smoke-check numerics against the plain-JAX f32 reference (bf16 MXU
        # operands inside the kernel -> generous tolerance).
        ref_scores, ref_value, ref_hidden = _ref_forward(
            params["raw"], observations, commands, ref_hidden)
        err = max(float(jnp.max(jnp.abs(scores[0] - ref_scores))),
                  float(jnp.max(jnp.abs(value[0] - ref_value))),
                  float(jnp.max(jnp.abs(carry[:, :hidden_size] - ref_hidden))))
        assert err < 0.1, f"kernel/reference mismatch: {err}"

    print("KERNEL_OK")
</pallas_src>

<mosaic_0001>
module attributes {stable_mosaic.version = 11 : i64} {
  func.func @_agent_kernel(%arg0: memref<48x1xi32, #tpu.memory_space<vmem>>, %arg1: memref<2x128xf32, #tpu.memory_space<vmem>>, %arg2: memref<100x384xbf16, #tpu.memory_space<vmem>>, %arg3: memref<128x1664xbf16, #tpu.memory_space<vmem>>, %arg4: memref<8x384xf32, #tpu.memory_space<vmem>>, %arg5: memref<2x128xf32, #tpu.memory_space<vmem>>) attributes {dimension_semantics = [], scalar_prefetch = 0 : i64, scratch_operands = 0 : i64, tpu.core_type = #tpu.core_type<tc>} {
    %c0 = arith.constant 0 : index
    %c0_0 = arith.constant 0 : index
    %0 = vector.load %arg0[%c0, %c0_0] : memref<48x1xi32, #tpu.memory_space<vmem>>, vector<48x1xi32>
    %1 = tpu.iota {dimensions = array<i32: 1>} : vector<48x100xi32>
    %2 = vector.broadcast %0 : vector<48x1xi32> to vector<48x100xi32>
    %3 = arith.cmpi eq, %2, %1 : vector<48x100xi32>
    %4 = arith.extui %3 : vector<48x100xi1> to vector<48x100xi32>
    %5 = arith.sitofp %4 : vector<48x100xi32> to vector<48x100xf32>
    %6 = arith.truncf %5 : vector<48x100xf32> to vector<48x100xbf16>
    %c0_1 = arith.constant 0 : index
    %c0_2 = arith.constant 0 : index
    %7 = vector.load %arg2[%c0_1, %c0_2] : memref<100x384xbf16, #tpu.memory_space<vmem>>, vector<100x384xbf16>
    %cst = arith.constant dense<0.000000e+00> : vector<48x384xf32>
    %8 = tpu.matmul %6, %7, %cst {dimension_numbers = #tpu.dot_dimension_numbers<[1], [0], [0], [1], [0, 0, 1, 1], [], []>} : vector<48x100xbf16>, vector<100x384xbf16>, vector<48x384xf32> -> vector<48x384xf32>
    %9 = tpu.iota {dimensions = array<i32: 0>} : vector<8x1xi32>
    %c2_i32 = arith.constant 2 : i32
    %10 = vector.broadcast %c2_i32 : i32 to vector<8x1xi32>
    %11 = arith.cmpi slt, %9, %10 : vector<8x1xi32>
    %c0_3 = arith.constant 0 : index
    %c0_4 = arith.constant 0 : index
    %12 = vector.load %arg4[%c0_3, %c0_4] : memref<8x384xf32, #tpu.memory_space<vmem>>, vector<1x384xf32>
    %c1 = arith.constant 1 : index
    %c0_5 = arith.constant 0 : index
    %13 = vector.load %arg4[%c1, %c0_5] : memref<8x384xf32, #tpu.memory_space<vmem>>, vector<1x384xf32>
    %14 = vector.shape_cast %11 : vector<8x1xi1> to vector<8x1xi1>
    %15 = vector.broadcast %14 : vector<8x1xi1> to vector<8x384xi1>
    %16 = vector.shape_cast %12 : vector<1x384xf32> to vector<1x384xf32>
    %17 = vector.broadcast %16 : vector<1x384xf32> to vector<8x384xf32>
    %18 = vector.shape_cast %13 : vector<1x384xf32> to vector<1x384xf32>
    %19 = vector.broadcast %18 : vector<1x384xf32> to vector<8x384xf32>
    %20 = arith.select %15, %17, %19 : vector<8x384xi1>, vector<8x384xf32>
    %21 = tpu.iota {dimensions = array<i32: 1>} : vector<2x128xi32>
    %c32_i32 = arith.constant 32 : i32
    %22 = vector.broadcast %c32_i32 : i32 to vector<2x128xi32>
    %23 = arith.cmpi slt, %21, %22 : vector<2x128xi32>
    %c0_6 = arith.constant 0 : index
    %c0_7 = arith.constant 0 : index
    %24 = vector.load %arg1[%c0_6, %c0_7] : memref<2x128xf32, #tpu.memory_space<vmem>>, vector<2x128xf32>
    %cst_8 = arith.constant 0.000000e+00 : f32
    %25 = vector.broadcast %cst_8 : f32 to vector<2x128xf32>
    %26 = arith.select %23, %24, %25 : vector<2x128xi1>, vector<2x128xf32>
    %27 = arith.truncf %26 : vector<2x128xf32> to vector<2x128xbf16>
    %c0_9 = arith.constant 0 : index
    %c1152 = arith.constant 1152 : index
    %28 = vector.load %arg3[%c0_9, %c1152] : memref<128x1664xbf16, #tpu.memory_space<vmem>>, vector<128x384xbf16>
    %cst_10 = arith.constant dense<0.000000e+00> : vector<2x384xf32>
    %29 = tpu.matmul %27, %28, %cst_10 {dimension_numbers = #tpu.dot_dimension_numbers<[1], [0], [0], [1], [0, 0, 1, 1], [], []>} : vector<2x128xbf16>, vector<128x384xbf16>, vector<2x384xf32> -> vector<2x384xf32>
    %c3 = arith.constant 3 : index
    %c0_11 = arith.constant 0 : index
    %30 = vector.load %arg4[%c3, %c0_11] : memref<8x384xf32, #tpu.memory_space<vmem>>, vector<1x384xf32>
    %31 = vector.broadcast %30 : vector<1x384xf32> to vector<2x384xf32>
    %32 = arith.addf %29, %31 : vector<2x384xf32>
    %c0_12 = arith.constant 0 : index
    %c0_13 = arith.constant 0 : index
    %33 = vector.load %arg3[%c0_12, %c0_13] : memref<128x1664xbf16, #tpu.memory_space<vmem>>, vector<128x768xbf16>
    %cst_14 = arith.constant 0.000000e+00 : f32
    %34 = vector.broadcast %cst_14 : f32 to vector<8x128xf32>
    %35 = vector.extract_strided_slice %8 {offsets = [0, 0], sizes = [8, 384], strides = [1, 1]} : vector<48x384xf32> to vector<8x384xf32>
    %36 = arith.truncf %34 : vector<8x128xf32> to vector<8x128xbf16>
    %cst_15 = arith.constant dense<0.000000e+00> : vector<8x768xf32>
    %37 = tpu.matmul %36, %33, %cst_15 {dimension_numbers = #tpu.dot_dimension_numbers<[1], [0], [0], [1], [0, 0, 1, 1], [], []>} : vector<8x128xbf16>, vector<128x768xbf16>, vector<8x768xf32> -> vector<8x768xf32>
    %38 = vector.extract_strided_slice %37 {offsets = [0, 0], sizes = [8, 384], strides = [1, 1]} : vector<8x768xf32> to vector<8x384xf32>
    %39 = vector.extract_strided_slice %37 {offsets = [0, 384], sizes = [8, 384], strides = [1, 1]} : vector<8x768xf32> to vector<8x384xf32>
    %40 = vector.shape_cast %11 : vector<8x1xi1> to vector<8x1xi1>
    %41 = vector.broadcast %40 : vector<8x1xi1> to vector<8x384xi1>
    %42 = arith.select %41, %38, %39 : vector<8x384xi1>, vector<8x384xf32>
    %43 = arith.addf %42, %20 : vector<8x384xf32>
    %44 = vector.extract_strided_slice %35 {offsets = [0, 0], sizes = [8, 256], strides = [1, 1]} : vector<8x384xf32> to vector<8x256xf32>
    %45 = vector.extract_strided_slice %43 {offsets = [0, 0], sizes = [8, 256], strides = [1, 1]} : vector<8x384xf32> to vector<8x256xf32>
    %46 = arith.addf %44, %45 : vector<8x256xf32>
    %47 = arith.negf %46 : vector<8x256xf32>
    %48 = math.exp %47 : vector<8x256xf32>
    %cst_16 = arith.constant 1.000000e+00 : f32
    %49 = vector.broadcast %cst_16 : f32 to vector<8x256xf32>
    %50 = arith.addf %49, %48 : vector<8x256xf32>
    %51 = arith.divf %49, %50 : vector<8x256xf32>
    %52 = vector.extract_strided_slice %51 {offsets = [0, 0], sizes = [8, 128], strides = [1, 1]} : vector<8x256xf32> to vector<8x128xf32>
    %53 = vector.extract_strided_slice %51 {offsets = [0, 128], sizes = [8, 128], strides = [1, 1]} : vector<8x256xf32> to vector<8x128xf32>
    %54 = vector.extract_strided_slice %35 {offsets = [0, 256], sizes = [8, 128], strides = [1, 1]} : vector<8x384xf32> to vector<8x128xf32>
    %55 = vector.extract_strided_slice %43 {offsets = [0, 256], sizes = [8, 128], strides = [1, 1]} : vector<8x384xf32> to vector<8x128xf32>
    %56 = arith.mulf %52, %55 : vector<8x128xf32>
    %57 = arith.addf %54, %56 : vector<8x128xf32>
    %58 = math.tanh %57 : vector<8x128xf32>
    %cst_17 = arith.constant 1.000000e+00 : f32
    %59 = vector.broadcast %cst_17 : f32 to vector<8x128xf32>
    %60 = arith.subf %59, %53 : vector<8x128xf32>
    %61 = arith.mulf %60, %58 : vector<8x128xf32>
    %62 = arith.mulf %53, %34 : vector<8x128xf32>
    %63 = arith.addf %61, %62 : vector<8x128xf32>
    %64 = vector.extract_strided_slice %8 {offsets = [8, 0], sizes = [8, 384], strides = [1, 1]} : vector<48x384xf32> to vector<8x384xf32>
    %65 = arith.truncf %63 : vector<8x128xf32> to vector<8x128xbf16>
    %cst_18 = arith.constant dense<0.000000e+00> : vector<8x768xf32>
    %66 = tpu.matmul %65, %33, %cst_18 {dimension_numbers = #tpu.dot_dimension_numbers<[1], [0], [0], [1], [0, 0, 1, 1], [], []>} : vector<8x128xbf16>, vector<128x768xbf16>, vector<8x768xf32> -> vector<8x768xf32>
    %67 = vector.extract_strided_slice %66 {offsets = [0, 0], sizes = [8, 384], strides = [1, 1]} : vector<8x768xf32> to vector<8x384xf32>
    %68 = vector.extract_strided_slice %66 {offsets = [0, 384], sizes = [8, 384], strides = [1, 1]} : vector<8x768xf32> to vector<8x384xf32>
    %69 = vector.shape_cast %11 : vector<8x1xi1> to vector<8x1xi1>
    %70 = vector.broadcast %69 : vector<8x1xi1> to vector<8x384xi1>
    %71 = arith.select %70, %67, %68 : vector<8x384xi1>, vector<8x384xf32>
    %72 = arith.addf %71, %20 : vector<8x384xf32>
    %73 = vector.extract_strided_slice %64 {offsets = [0, 0], sizes = [8, 256], strides = [1, 1]} : vector<8x384xf32> to vector<8x256xf32>
    %74 = vector.extract_strided_slice %72 {offsets = [0, 0], sizes = [8, 256], strides = [1, 1]} : vector<8x384xf32> to vector<8x256xf32>
    %75 = arith.addf %73, %74 : vector<8x256xf32>
    %76 = arith.negf %75 : vector<8x256xf32>
    %77 = math.exp %76 : vector<8x256xf32>
    %cst_19 = arith.constant 1.000000e+00 : f32
    %78 = vector.broadcast %cst_19 : f32 to vector<8x256xf32>
    %79 = arith.addf %78, %77 : vector<8x256xf32>
    %80 = arith.divf %78, %79 : vector<8x256xf32>
    %81 = vector.extract_strided_slice %80 {offsets = [0, 0], sizes = [8, 128], strides = [1, 1]} : vector<8x256xf32> to vector<8x128xf32>
    %82 = vector.extract_strided_slice %80 {offsets = [0, 128], sizes = [8, 128], strides = [1, 1]} : vector<8x256xf32> to vector<8x128xf32>
    %83 = vector.extract_strided_slice %64 {offsets = [0, 256], sizes = [8, 128], strides = [1, 1]} : vector<8x384xf32> to vector<8x128xf32>
    %84 = vector.extract_strided_slice %72 {offsets = [0, 256], sizes = [8, 128], strides = [1, 1]} : vector<8x384xf32> to vector<8x128xf32>
    %85 = arith.mulf %81, %84 : vector<8x128xf32>
    %86 = arith.addf %83, %85 : vector<8x128xf32>
    %87 = math.tanh %86 : vector<8x128xf32>
    %cst_20 = arith.constant 1.000000e+00 : f32
    %88 = vector.broadcast %cst_20 : f32 to vector<8x128xf32>
    %89 = arith.subf %88, %82 : vector<8x128xf32>
    %90 = arith.mulf %89, %87 : vector<8x128xf32>
    %91 = arith.mulf %82, %63 : vector<8x128xf32>
    %92 = arith.addf %90, %91 : vector<8x128xf32>
    %93 = vector.extract_strided_slice %8 {offsets = [16, 0], sizes = [8, 384], strides = [1, 1]} : vector<48x384xf32> to vector<8x384xf32>
    %94 = arith.truncf %92 : vector<8x128xf32> to vector<8x128xbf16>
    %cst_21 = arith.constant dense<0.000000e+00> : vector<8x768xf32>
    %95 = tpu.matmul %94, %33, %cst_21 {dimension_numbers = #tpu.dot_dimension_numbers<[1], [0], [0], [1], [0, 0, 1, 1], [], []>} : vector<8x128xbf16>, vector<128x768xbf16>, vector<8x768xf32> -> vector<8x768xf32>
    %96 = vector.extract_strided_slice %95 {offsets = [0, 0], sizes = [8, 384], strides = [1, 1]} : vector<8x768xf32> to vector<8x384xf32>
    %97 = vector.extract_strided_slice %95 {offsets = [0, 384], sizes = [8, 384], strides = [1, 1]} : vector<8x768xf32> to vector<8x384xf32>
    %98 = vector.shape_cast %11 : vector<8x1xi1> to vector<8x1xi1>
    %99 = vector.broadcast %98 : vector<8x1xi1> to vector<8x384xi1>
    %100 = arith.select %99, %96, %97 : vector<8x384xi1>, vector<8x384xf32>
    %101 = arith.addf %100, %20 : vector<8x384xf32>
    %102 = vector.extract_strided_slice %93 {offsets = [0, 0], sizes = [8, 256], strides = [1, 1]} : vector<8x384xf32> to vector<8x256xf32>
    %103 = vector.extract_strided_slice %101 {offsets = [0, 0], sizes = [8, 256], strides = [1, 1]} : vector<8x384xf32> to vector<8x256xf32>
    %104 = arith.addf %102, %103 : vector<8x256xf32>
    %105 = arith.negf %104 : vector<8x256xf32>
    %106 = math.exp %105 : vector<8x256xf32>
    %cst_22 = arith.constant 1.000000e+00 : f32
    %107 = vector.broadcast %cst_22 : f32 to vector<8x256xf32>
    %108 = arith.addf %107, %106 : vector<8x256xf32>
    %109 = arith.divf %107, %108 : vector<8x256xf32>
    %110 = vector.extract_strided_slice %109 {offsets = [0, 0], sizes = [8, 128], strides = [1, 1]} : vector<8x256xf32> to vector<8x128xf32>
    %111 = vector.extract_strided_slice %109 {offsets = [0, 128], sizes = [8, 128], strides = [1, 1]} : vector<8x256xf32> to vector<8x128xf32>
    %112 = vector.extract_strided_slice %93 {offsets = [0, 256], sizes = [8, 128], strides = [1, 1]} : vector<8x384xf32> to vector<8x128xf32>
    %113 = vector.extract_strided_slice %101 {offsets = [0, 256], sizes = [8, 128], strides = [1, 1]} : vector<8x384xf32> to vector<8x128xf32>
    %114 = arith.mulf %110, %113 : vector<8x128xf32>
    %115 = arith.addf %112, %114 : vector<8x128xf32>
    %116 = math.tanh %115 : vector<8x128xf32>
    %cst_23 = arith.constant 1.000000e+00 : f32
    %117 = vector.broadcast %cst_23 : f32 to vector<8x128xf32>
    %118 = arith.subf %117, %111 : vector<8x128xf32>
    %119 = arith.mulf %118, %116 : vector<8x128xf32>
    %120 = arith.mulf %111, %92 : vector<8x128xf32>
    %121 = arith.addf %119, %120 : vector<8x128xf32>
    %122 = vector.extract_strided_slice %8 {offsets = [24, 0], sizes = [8, 384], strides = [1, 1]} : vector<48x384xf32> to vector<8x384xf32>
    %123 = arith.truncf %121 : vector<8x128xf32> to vector<8x128xbf16>
    %cst_24 = arith.constant dense<0.000000e+00> : vector<8x768xf32>
    %124 = tpu.matmul %123, %33, %cst_24 {dimension_numbers = #tpu.dot_dimension_numbers<[1], [0], [0], [1], [0, 0, 1, 1], [], []>} : vector<8x128xbf16>, vector<128x768xbf16>, vector<8x768xf32> -> vector<8x768xf32>
    %125 = vector.extract_strided_slice %124 {offsets = [0, 0], sizes = [8, 384], strides = [1, 1]} : vector<8x768xf32> to vector<8x384xf32>
    %126 = vector.extract_strided_slice %124 {offsets = [0, 384], sizes = [8, 384], strides = [1, 1]} : vector<8x768xf32> to vector<8x384xf32>
    %127 = vector.shape_cast %11 : vector<8x1xi1> to vector<8x1xi1>
    %128 = vector.broadcast %127 : vector<8x1xi1> to vector<8x384xi1>
    %129 = arith.select %128, %125, %126 : vector<8x384xi1>, vector<8x384xf32>
    %130 = arith.addf %129, %20 : vector<8x384xf32>
    %131 = vector.extract_strided_slice %122 {offsets = [0, 0], sizes = [8, 256], strides = [1, 1]} : vector<8x384xf32> to vector<8x256xf32>
    %132 = vector.extract_strided_slice %130 {offsets = [0, 0], sizes = [8, 256], strides = [1, 1]} : vector<8x384xf32> to vector<8x256xf32>
    %133 = arith.addf %131, %132 : vector<8x256xf32>
    %134 = arith.negf %133 : vector<8x256xf32>
    %135 = math.exp %134 : vector<8x256xf32>
    %cst_25 = arith.constant 1.000000e+00 : f32
    %136 = vector.broadcast %cst_25 : f32 to vector<8x256xf32>
    %137 = arith.addf %136, %135 : vector<8x256xf32>
    %138 = arith.divf %136, %137 : vector<8x256xf32>
    %139 = vector.extract_strided_slice %138 {offsets = [0, 0], sizes = [8, 128], strides = [1, 1]} : vector<8x256xf32> to vector<8x128xf32>
    %140 = vector.extract_strided_slice %138 {offsets = [0, 128], sizes = [8, 128], strides = [1, 1]} : vector<8x256xf32> to vector<8x128xf32>
    %141 = vector.extract_strided_slice %122 {offsets = [0, 256], sizes = [8, 128], strides = [1, 1]} : vector<8x384xf32> to vector<8x128xf32>
    %142 = vector.extract_strided_slice %130 {offsets = [0, 256], sizes = [8, 128], strides = [1, 1]} : vector<8x384xf32> to vector<8x128xf32>
    %143 = arith.mulf %139, %142 : vector<8x128xf32>
    %144 = arith.addf %141, %143 : vector<8x128xf32>
    %145 = math.tanh %144 : vector<8x128xf32>
    %cst_26 = arith.constant 1.000000e+00 : f32
    %146 = vector.broadcast %cst_26 : f32 to vector<8x128xf32>
    %147 = arith.subf %146, %140 : vector<8x128xf32>
    %148 = arith.mulf %147, %145 : vector<8x128xf32>
    %149 = arith.mulf %140, %121 : vector<8x128xf32>
    %150 = arith.addf %148, %149 : vector<8x128xf32>
    %151 = vector.extract_strided_slice %8 {offsets = [32, 0], sizes = [8, 384], strides = [1, 1]} : vector<48x384xf32> to vector<8x384xf32>
    %152 = arith.truncf %150 : vector<8x128xf32> to vector<8x128xbf16>
    %cst_27 = arith.constant dense<0.000000e+00> : vector<8x768xf32>
    %153 = tpu.matmul %152, %33, %cst_27 {dimension_numbers = #tpu.dot_dimension_numbers<[1], [0], [0], [1], [0, 0, 1, 1], [], []>} : vector<8x128xbf16>, vector<128x768xbf16>, vector<8x768xf32> -> vector<8x768xf32>
    %154 = vector.extract_strided_slice %153 {offsets = [0, 0], sizes = [8, 384], strides = [1, 1]} : vector<8x768xf32> to vector<8x384xf32>
    %155 = vector.extract_strided_slice %153 {offsets = [0, 384], sizes = [8, 384], strides = [1, 1]} : vector<8x768xf32> to vector<8x384xf32>
    %156 = vector.shape_cast %11 : vector<8x1xi1> to vector<8x1xi1>
    %157 = vector.broadcast %156 : vector<8x1xi1> to vector<8x384xi1>
    %158 = arith.select %157, %154, %155 : vector<8x384xi1>, vector<8x384xf32>
    %159 = arith.addf %158, %20 : vector<8x384xf32>
    %160 = vector.extract_strided_slice %151 {offsets = [0, 0], sizes = [8, 256], strides = [1, 1]} : vector<8x384xf32> to vector<8x256xf32>
    %161 = vector.extract_strided_slice %159 {offsets = [0, 0], sizes = [8, 256], strides = [1, 1]} : vector<8x384xf32> to vector<8x256xf32>
    %162 = arith.addf %160, %161 : vector<8x256xf32>
    %163 = arith.negf %162 : vector<8x256xf32>
    %164 = math.exp %163 : vector<8x256xf32>
    %cst_28 = arith.constant 1.000000e+00 : f32
    %165 = vector.broadcast %cst_28 : f32 to vector<8x256xf32>
    %166 = arith.addf %165, %164 : vector<8x256xf32>
    %167 = arith.divf %165, %166 : vector<8x256xf32>
    %168 = vector.extract_strided_slice %167 {offsets = [0, 0], sizes = [8, 128], strides = [1, 1]} : vector<8x256xf32> to vector<8x128xf32>
    %169 = vector.extract_strided_slice %167 {offsets = [0, 128], sizes = [8, 128], strides = [1, 1]} : vector<8x256xf32> to vector<8x128xf32>
    %170 = vector.extract_strided_slice %151 {offsets = [0, 256], sizes = [8, 128], strides = [1, 1]} : vector<8x384xf32> to vector<8x128xf32>
    %171 = vector.extract_strided_slice %159 {offsets = [0, 256], sizes = [8, 128], strides = [1, 1]} : vector<8x384xf32> to vector<8x128xf32>
    %172 = arith.mulf %168, %171 : vector<8x128xf32>
    %173 = arith.addf %170, %172 : vector<8x128xf32>
    %174 = math.tanh %173 : vector<8x128xf32>
    %cst_29 = arith.constant 1.000000e+00 : f32
    %175 = vector.broadcast %cst_29 : f32 to vector<8x128xf32>
    %176 = arith.subf %175, %169 : vector<8x128xf32>
    %177 = arith.mulf %176, %174 : vector<8x128xf32>
    %178 = arith.mulf %169, %150 : vector<8x128xf32>
    %179 = arith.addf %177, %178 : vector<8x128xf32>
    %180 = vector.extract_strided_slice %8 {offsets = [40, 0], sizes = [8, 384], strides = [1, 1]} : vector<48x384xf32> to vector<8x384xf32>
    %181 = arith.truncf %179 : vector<8x128xf32> to vector<8x128xbf16>
    %cst_30 = arith.constant dense<0.000000e+00> : vector<8x768xf32>
    %182 = tpu.matmul %181, %33, %cst_30 {dimension_numbers = #tpu.dot_dimension_numbers<[1], [0], [0], [1], [0, 0, 1, 1], [], []>} : vector<8x128xbf16>, vector<128x768xbf16>, vector<8x768xf32> -> vector<8x768xf32>
    %183 = vector.extract_strided_slice %182 {offsets = [0, 0], sizes = [8, 384], strides = [1, 1]} : vector<8x768xf32> to vector<8x384xf32>
    %184 = vector.extract_strided_slice %182 {offsets = [0, 384], sizes = [8, 384], strides = [1, 1]} : vector<8x768xf32> to vector<8x384xf32>
    %185 = vector.shape_cast %11 : vector<8x1xi1> to vector<8x1xi1>
    %186 = vector.broadcast %185 : vector<8x1xi1> to vector<8x384xi1>
    %187 = arith.select %186, %183, %184 : vector<8x384xi1>, vector<8x384xf32>
    %188 = arith.addf %187, %20 : vector<8x384xf32>
    %189 = vector.extract_strided_slice %180 {offsets = [0, 0], sizes = [8, 256], strides = [1, 1]} : vector<8x384xf32> to vector<8x256xf32>
    %190 = vector.extract_strided_slice %188 {offsets = [0, 0], sizes = [8, 256], strides = [1, 1]} : vector<8x384xf32> to vector<8x256xf32>
    %191 = arith.addf %189, %190 : vector<8x256xf32>
    %192 = arith.negf %191 : vector<8x256xf32>
    %193 = math.exp %192 : vector<8x256xf32>
    %cst_31 = arith.constant 1.000000e+00 : f32
    %194 = vector.broadcast %cst_31 : f32 to vector<8x256xf32>
    %195 = arith.addf %194, %193 : vector<8x256xf32>
    %196 = arith.divf %194, %195 : vector<8x256xf32>
    %197 = vector.extract_strided_slice %196 {offsets = [0, 0], sizes = [8, 128], strides = [1, 1]} : vector<8x256xf32> to vector<8x128xf32>
    %198 = vector.extract_strided_slice %196 {offsets = [0, 128], sizes = [8, 128], strides = [1, 1]} : vector<8x256xf32> to vector<8x128xf32>
    %199 = vector.extract_strided_slice %180 {offsets = [0, 256], sizes = [8, 128], strides = [1, 1]} : vector<8x384xf32> to vector<8x128xf32>
    %200 = vector.extract_strided_slice %188 {offsets = [0, 256], sizes = [8, 128], strides = [1, 1]} : vector<8x384xf32> to vector<8x128xf32>
    %201 = arith.mulf %197, %200 : vector<8x128xf32>
    %202 = arith.addf %199, %201 : vector<8x128xf32>
    %203 = math.tanh %202 : vector<8x128xf32>
    %cst_32 = arith.constant 1.000000e+00 : f32
    %204 = vector.broadcast %cst_32 : f32 to vector<8x128xf32>
    %205 = arith.subf %204, %198 : vector<8x128xf32>
    %206 = arith.mulf %205, %203 : vector<8x128xf32>
    %207 = arith.mulf %198, %179 : vector<8x128xf32>
    %208 = arith.addf %206, %207 : vector<8x128xf32>
    %209 = vector.shape_cast %11 : vector<8x1xi1> to vector<8x1xi1>
    %210 = vector.broadcast %209 : vector<8x1xi1> to vector<8x128xi1>
    %211 = arith.select %210, %208, %179 : vector<8x128xi1>, vector<8x128xf32>
    %212 = vector.extract_strided_slice %211 {offsets = [0, 0], sizes = [2, 128], strides = [1, 1]} : vector<8x128xf32> to vector<2x128xf32>
    %213 = vector.extract_strided_slice %211 {offsets = [2, 0], sizes = [4, 128], strides = [1, 1]} : vector<8x128xf32> to vector<4x128xf32>
    %214 = arith.truncf %212 : vector<2x128xf32> to vector<2x128xbf16>
    %c0_33 = arith.constant 0 : index
    %c768 = arith.constant 768 : index
    %215 = vector.load %arg3[%c0_33, %c768] : memref<128x1664xbf16, #tpu.memory_space<vmem>>, vector<128x384xbf16>
    %cst_34 = arith.constant dense<0.000000e+00> : vector<2x384xf32>
    %216 = tpu.matmul %214, %215, %cst_34 {dimension_numbers = #tpu.dot_dimension_numbers<[1], [0], [0], [1], [0, 0, 1, 1], [], []>} : vector<2x128xbf16>, vector<128x384xbf16>, vector<2x384xf32> -> vector<2x384xf32>
    %c2 = arith.constant 2 : index
    %c0_35 = arith.constant 0 : index
    %217 = vector.load %arg4[%c2, %c0_35] : memref<8x384xf32, #tpu.memory_space<vmem>>, vector<1x384xf32>
    %218 = vector.broadcast %217 : vector<1x384xf32> to vector<2x384xf32>
    %219 = arith.addf %216, %218 : vector<2x384xf32>
    %220 = vector.extract_strided_slice %219 {offsets = [0, 0], sizes = [2, 256], strides = [1, 1]} : vector<2x384xf32> to vector<2x256xf32>
    %221 = vector.extract_strided_slice %32 {offsets = [0, 0], sizes = [2, 256], strides = [1, 1]} : vector<2x384xf32> to vector<2x256xf32>
    %222 = arith.addf %220, %221 : vector<2x256xf32>
    %223 = arith.negf %222 : vector<2x256xf32>
    %224 = math.exp %223 : vector<2x256xf32>
    %cst_36 = arith.constant 1.000000e+00 : f32
    %225 = vector.broadcast %cst_36 : f32 to vector<2x256xf32>
    %226 = arith.addf %225, %224 : vector<2x256xf32>
    %227 = arith.divf %225, %226 : vector<2x256xf32>
    %228 = vector.extract_strided_slice %227 {offsets = [0, 0], sizes = [2, 128], strides = [1, 1]} : vector<2x256xf32> to vector<2x128xf32>
    %229 = vector.extract_strided_slice %227 {offsets = [0, 128], sizes = [2, 128], strides = [1, 1]} : vector<2x256xf32> to vector<2x128xf32>
    %230 = vector.extract_strided_slice %219 {offsets = [0, 256], sizes = [2, 128], strides = [1, 1]} : vector<2x384xf32> to vector<2x128xf32>
    %231 = vector.extract_strided_slice %32 {offsets = [0, 256], sizes = [2, 128], strides = [1, 1]} : vector<2x384xf32> to vector<2x128xf32>
    %232 = arith.mulf %228, %231 : vector<2x128xf32>
    %233 = arith.addf %230, %232 : vector<2x128xf32>
    %234 = math.tanh %233 : vector<2x128xf32>
    %cst_37 = arith.constant 1.000000e+00 : f32
    %235 = vector.broadcast %cst_37 : f32 to vector<2x128xf32>
    %236 = arith.subf %235, %229 : vector<2x128xf32>
    %237 = arith.mulf %236, %234 : vector<2x128xf32>
    %238 = arith.mulf %229, %26 : vector<2x128xf32>
    %239 = arith.addf %237, %238 : vector<2x128xf32>
    %240 = arith.truncf %239 : vector<2x128xf32> to vector<2x128xbf16>
    %c0_38 = arith.constant 0 : index
    %c1536 = arith.constant 1536 : index
    %241 = vector.load %arg3[%c0_38, %c1536] : memref<128x1664xbf16, #tpu.memory_space<vmem>>, vector<128x128xbf16>
    %cst_39 = arith.constant dense<0.000000e+00> : vector<2x128xf32>
    %242 = tpu.matmul %240, %241, %cst_39 {dimension_numbers = #tpu.dot_dimension_numbers<[1], [0], [0], [1], [0, 0, 1, 1], [], []>} : vector<2x128xbf16>, vector<128x128xbf16>, vector<2x128xf32> -> vector<2x128xf32>
    %243 = vector.extract_strided_slice %242 {offsets = [0, 1], sizes = [2, 1], strides = [1, 1]} : vector<2x128xf32> to vector<2x1xf32>
    %c4 = arith.constant 4 : index
    %c1_40 = arith.constant 1 : index
    %244 = vector.load %arg4[%c4, %c1_40] : memref<8x384xf32, #tpu.memory_space<vmem>>, vector<1x1xf32>
    %245 = vector.broadcast %244 : vector<1x1xf32> to vector<2x1xf32>
    %246 = arith.addf %243, %245 : vector<2x1xf32>
    %c5 = arith.constant 5 : index
    %c0_41 = arith.constant 0 : index
    %247 = vector.load %arg4[%c5, %c0_41] : memref<8x384xf32, #tpu.memory_space<vmem>>, vector<1x128xf32>
    %248 = arith.truncf %247 : vector<1x128xf32> to vector<1x128xbf16>
    %249 = arith.truncf %213 : vector<4x128xf32> to vector<4x128xbf16>
    %cst_42 = arith.constant dense<0.000000e+00> : vector<1x4xf32>
    %250 = tpu.matmul %248, %249, %cst_42 {dimension_numbers = #tpu.dot_dimension_numbers<[1], [1], [0], [0], [0, 0, 1, 0], [], []>} : vector<1x128xbf16>, vector<4x128xbf16>, vector<1x4xf32> -> vector<1x4xf32>
    %251 = vector.extract_strided_slice %242 {offsets = [0, 0], sizes = [2, 1], strides = [1, 1]} : vector<2x128xf32> to vector<2x1xf32>
    %252 = vector.broadcast %251 : vector<2x1xf32> to vector<2x4xf32>
    %253 = vector.broadcast %250 : vector<1x4xf32> to vector<2x4xf32>
    %254 = arith.addf %252, %253 : vector<2x4xf32>
    %c4_43 = arith.constant 4 : index
    %c0_44 = arith.constant 0 : index
    %255 = vector.load %arg4[%c4_43, %c0_44] : memref<8x384xf32, #tpu.memory_space<vmem>>, vector<1x1xf32>
    %256 = vector.broadcast %255 : vector<1x1xf32> to vector<2x4xf32>
    %257 = arith.addf %254, %256 : vector<2x4xf32>
    %cst_45 = arith.constant 0.000000e+00 : f32
    %258 = vector.broadcast %cst_45 : f32 to vector<2x4xf32>
    %259 = arith.maximumf %257, %258 : vector<2x4xf32>
    %c0_46 = arith.constant 0 : index
    %c0_47 = arith.constant 0 : index
    %260 = vector.load %arg5[%c0_46, %c0_47] : memref<2x128xf32, #tpu.memory_space<vmem>>, vector<2x128xf32>
    tpu.vector_store %arg5[%c0_46, %c0_47], %239 {strides = array<i32>} : memref<2x128xf32, #tpu.memory_space<vmem>>, vector<2x128xf32>,
    %c0_48 = arith.constant 0 : index
    %c32 = arith.constant 32 : index
    %261 = vector.load %arg5[%c0_48, %c32] : memref<2x128xf32, #tpu.memory_space<vmem>>, vector<2x1xf32>
    tpu.vector_store %arg5[%c0_48, %c32], %246 {strides = array<i32>} : memref<2x128xf32, #tpu.memory_space<vmem>>, vector<2x1xf32>,
    %c0_49 = arith.constant 0 : index
    %c64 = arith.constant 64 : index
    %262 = vector.load %arg5[%c0_49, %c64] : memref<2x128xf32, #tpu.memory_space<vmem>>, vector<2x4xf32>
    tpu.vector_store %arg5[%c0_49, %c64], %259 {strides = array<i32>} : memref<2x128xf32, #tpu.memory_space<vmem>>, vector<2x4xf32>,
    return
  }
}

</mosaic_0001>

<llo_original>
// kernel: tpu_custom_call.1
$region0: #{tpu_custom_call.1}
  #allocation0 [shape = 'u32[]', space=smem, size = 0x4, offset = 0x4, fixed_abs, tag = 'smem constant byte address 0x4 - core index']
  #allocation1 [shape = 'u32[144,128]{1,0:T(1,128)}', space=vmem, size = 0x12000, scoped, tag = 'internal scratch']
  %s0 = inlined_call_operand.vmem [shape: s32[48,1], index: 0, kind: input, shape index: {}]
  %s1 = inlined_call_operand.hbm [shape: f32[2,128], index: 1, kind: input, shape index: {}, may-alias: {1,5}]
  %s2 = inlined_call_operand.hbm [shape: bf16[100,384], index: 2, kind: input, shape index: {}]
  %s3 = inlined_call_operand.hbm [shape: bf16[128,1664], index: 3, kind: input, shape index: {}]
  %s4 = inlined_call_operand.vmem [shape: f32[8,384], index: 4, kind: input, shape index: {}]
  %s5 = inlined_call_operand.hbm [shape: f32[2,128], index: 5, kind: output, shape index: {}, may-alias: {1,5}]
  %s6 = sld [smem:[#allocation0]]
  $region42: #{tpu_custom_call.1} parent=0
    _
  %s8 = ssub.s32 1, %s6
  %s9 = scalar_select 0, %s8, %s6
  $region1: #{tpu_custom_call.1} parent=0
    #allocation2 [shape = 'u8[1024]{0}', space=vmem, size = 0x400, scoped, tag = 'input window, operand 1, single buffered']
    #allocation3 [shape = 's32[1]{0}', space=sflag, size = 0x4, scoped, tag = 'scoped memory for tpu_custom_call.1']
    #allocation4 [shape = 's32[1]{0}', space=sflag, size = 0x4, scoped, tag = 'scoped memory for tpu_custom_call.1']
    #allocation5 [shape = 'u8[79872]{0}', space=vmem, size = 0x13800, scoped, tag = 'input window, operand 2, single buffered']
    #allocation6 [shape = 's32[1]{0}', space=sflag, size = 0x4, scoped, tag = 'scoped memory for tpu_custom_call.1']
    #allocation7 [shape = 'u8[425984]{0}', space=vmem, size = 0x68000, scoped, tag = 'input window, operand 3, single buffered']
    #allocation8 [shape = 'u8[1024]{0}', space=vmem, size = 0x400, scoped, tag = 'output window, operand 0, single buffered']
    %10 = vsyncpa [#allocation3], 0
    %11 = vsyncpa [#allocation6], 0
    %12 = vsyncpa [#allocation4], 0
    // Predicated region
    $region2: #{tpu_custom_call.1} parent=1 // pred_check
      _
    $region3: #{tpu_custom_call.1} parent=1 // pred_check_branch
      %14 = sbr.rel (0) target = $region5
    $region4: #{tpu_custom_call.1} parent=1 // pred_region
      _
    $region5: #{tpu_custom_call.1} parent=1 // pred_fallthru
      _
    // Predicated region
    $region6: #{tpu_custom_call.1} parent=1 // pred_check
      _
    $region7: #{tpu_custom_call.1} parent=1 // pred_check_branch
      %16 = sbr.rel (0) target = $region9
    $region8: #{tpu_custom_call.1} parent=1 // pred_region
      %s18 = ssub.s32 32, 32
      %19 = vsyncadd [#allocation3], %s18
      %s21 = sshll.u32 [#allocation2], 4
      %s22 = int_to_ptr.vmem [resolvable:$true] %s21
      %24 = dma.hbm_to_vmem [thread:$0]  %s1, 32, %s22, [#allocation3]
    $region9: #{tpu_custom_call.1} parent=1 // pred_fallthru
      _
    // Predicated region
    $region10: #{tpu_custom_call.1} parent=1 // pred_check
      _
    $region11: #{tpu_custom_call.1} parent=1 // pred_check_branch
      %26 = sbr.rel (0) target = $region13
    $region12: #{tpu_custom_call.1} parent=1 // pred_region
      %s28 = ssub.s32 2496, 2496
      %29 = vsyncadd [#allocation6], %s28
      %s30 = sshll.u32 [#allocation5], 4
      %s31 = int_to_ptr.vmem [resolvable:$true] %s30
      %36 = dma.hbm_to_vmem [thread:$0]  %s2, 2496, %s31, [#allocation6], 192, 192, 12
    $region13: #{tpu_custom_call.1} parent=1 // pred_fallthru
      _
    // Predicated region
    $region14: #{tpu_custom_call.1} parent=1 // pred_check
      _
    $region15: #{tpu_custom_call.1} parent=1 // pred_check_branch
      %38 = sbr.rel (0) target = $region17
    $region16: #{tpu_custom_call.1} parent=1 // pred_region
      %s40 = ssub.s32 13312, 13312
      %41 = vsyncadd [#allocation6], %s40
      %s42 = sshll.u32 [#allocation7], 4
      %s43 = int_to_ptr.vmem [resolvable:$true] %s42
      %48 = dma.hbm_to_vmem [thread:$0]  %s3, 13312, %s43, [#allocation6], 832, 832, 52
    $region17: #{tpu_custom_call.1} parent=1 // pred_fallthru
      _
    // Predicated region
    $region18: #{tpu_custom_call.1} parent=1 // pred_check
      _
    $region19: #{tpu_custom_call.1} parent=1 // pred_check_branch
      %50 = sbr.rel (0) target = $region21
    $region20: #{tpu_custom_call.1} parent=1 // pred_region
      _
    $region21: #{tpu_custom_call.1} parent=1 // pred_fallthru
      _
    // Predicated region
    $region22: #{tpu_custom_call.1} parent=1 // pred_check
      _
    $region23: #{tpu_custom_call.1} parent=1 // pred_check_branch
      %52 = sbr.rel (0) target = $region25
    $region24: #{tpu_custom_call.1} parent=1 // pred_region
      %53 = dma.done [#allocation3], 32
    $region25: #{tpu_custom_call.1} parent=1 // pred_fallthru
      _
    // Predicated region
    $region26: #{tpu_custom_call.1} parent=1 // pred_check
      _
    $region27: #{tpu_custom_call.1} parent=1 // pred_check_branch
      %55 = sbr.rel (0) target = $region29
    $region28: #{tpu_custom_call.1} parent=1 // pred_region
      %56 = dma.done [#allocation6], 2496
    $region29: #{tpu_custom_call.1} parent=1 // pred_fallthru
      _
    // Predicated region
    $region30: #{tpu_custom_call.1} parent=1 // pred_check
      _
    $region31: #{tpu_custom_call.1} parent=1 // pred_check_branch
      %58 = sbr.rel (0) target = $region33
    $region32: #{tpu_custom_call.1} parent=1 // pred_region
      %59 = dma.done [#allocation6], 13312
    $region33: #{tpu_custom_call.1} parent=1 // pred_fallthru
      _
    %v61 = vld [vmem:[%s0] sm:$0xff]
    %v62 = vld [vmem:[%s0 + $0x8] sm:$0xff]
    %v63 = vld [vmem:[%s0 + $0x10] sm:$0xff]
    %v64 = vld [vmem:[%s0 + $0x18] sm:$0xff]
    %v65 = vld [vmem:[%s0 + $0x20] sm:$0xff]
    %v66 = vld [vmem:[%s0 + $0x28] sm:$0xff]
    %v67 = vlaneseq
    %v68 = vand.u32 %v67, 127
    %69 = vset.pattern.permute.xlu0 0
    %70 = vperm.xlu0 %69, %v61
    %v71 = vpop.permute.xlu0 %70
    %72 = vset.pattern.permute.xlu0 0
    %73 = vperm.xlu0 %72, %v62
    %v74 = vpop.permute.xlu0 %73
    %75 = vset.pattern.permute.xlu0 0
    %76 = vperm.xlu0 %75, %v63
    %v77 = vpop.permute.xlu0 %76
    %78 = vset.pattern.permute.xlu0 0
    %79 = vperm.xlu0 %78, %v64
    %v80 = vpop.permute.xlu0 %79
    %81 = vset.pattern.permute.xlu0 0
    %82 = vperm.xlu0 %81, %v65
    %v83 = vpop.permute.xlu0 %82
    %84 = vset.pattern.permute.xlu0 0
    %85 = vperm.xlu0 %84, %v66
    %v86 = vpop.permute.xlu0 %85
    %vm87 = vcmp.eq.s32.totalorder %v71, %v68
    %vm88 = vcmp.eq.s32.totalorder %v74, %v68
    %vm89 = vcmp.eq.s32.totalorder %v77, %v68
    %vm90 = vcmp.eq.s32.totalorder %v80, %v68
    %vm91 = vcmp.eq.s32.totalorder %v83, %v68
    %vm92 = vcmp.eq.s32.totalorder %v86, %v68
    %v93 = vsel %vm87, 1, 0
    %v94 = vsel %vm88, 1, 0
    %v95 = vsel %vm89, 1, 0
    %v96 = vsel %vm90, 1, 0
    %v97 = vsel %vm91, 1, 0
    %v98 = vsel %vm92, 1, 0
    %v99 = vcvt.s32.f32 %v93
    %v100 = vcvt.s32.f32 %v94
    %v101 = vcvt.s32.f32 %v95
    %v102 = vcvt.s32.f32 %v96
    %v103 = vcvt.s32.f32 %v97
    %v104 = vcvt.s32.f32 %v98
    %v105 = vpack.c.bf16 %v100, %v99
    %v106 = vpack.c.bf16 %v102, %v101
    %v107 = vpack.c.bf16 %v104, %v103
    %v108 = vld [vmem:[#allocation5] sm:$0xff]
    %v109 = vld [vmem:[#allocation5 + $0x8] sm:$0xf]
    %v110 = vld [vmem:[#allocation5 + $0xc] sm:$0xff]
    %v111 = vld [vmem:[#allocation5 + $0x14] sm:$0xf]
    %v112 = vld [vmem:[#allocation5 + $0x18] sm:$0xff]
    %v113 = vld [vmem:[#allocation5 + $0x20] sm:$0xf]
    %v114 = vld [vmem:[#allocation5 + $0x24] sm:$0xff]
    %v115 = vld [vmem:[#allocation5 + $0x2c] sm:$0xf]
    %v116 = vld [vmem:[#allocation5 + $0x30] sm:$0xff]
    %v117 = vld [vmem:[#allocation5 + $0x38] sm:$0xf]
    %v118 = vld [vmem:[#allocation5 + $0x3c] sm:$0xff]
    %v119 = vld [vmem:[#allocation5 + $0x44] sm:$0xf]
    %v120 = vld [vmem:[#allocation5 + $0x48] sm:$0xff]
    %v121 = vld [vmem:[#allocation5 + $0x50] sm:$0xf]
    %v122 = vld [vmem:[#allocation5 + $0x54] sm:$0xff]
    %v123 = vld [vmem:[#allocation5 + $0x5c] sm:$0xf]
    %v124 = vld [vmem:[#allocation5 + $0x60] sm:$0xff]
    %v125 = vld [vmem:[#allocation5 + $0x68] sm:$0xf]
    %v126 = vld [vmem:[#allocation5 + $0x6c] sm:$0xff]
    %v127 = vld [vmem:[#allocation5 + $0x74] sm:$0xf]
    %v128 = vld [vmem:[#allocation5 + $0x78] sm:$0xff]
    %v129 = vld [vmem:[#allocation5 + $0x80] sm:$0xf]
    %v130 = vld [vmem:[#allocation5 + $0x84] sm:$0xff]
    %v131 = vld [vmem:[#allocation5 + $0x8c] sm:$0xf]
    %v132 = vld [vmem:[#allocation5 + $0x90] sm:$0x33]
    %v133 = vld [vmem:[#allocation5 + $0x98] sm:$0x3]
    %v160 = vunpack.c.l.b16 %v108
    %v161 = vunpack.c.h.b16 %v108
    %v162 = vunpack.c.l.b16 %v109
    %v163 = vunpack.c.l.b16 %v110
    %v164 = vunpack.c.h.b16 %v110
    %v165 = vunpack.c.l.b16 %v111
    %v166 = vunpack.c.l.b16 %v112
    %v167 = vunpack.c.h.b16 %v112
    %v168 = vunpack.c.l.b16 %v113
    %v169 = vunpack.c.l.b16 %v114
    %v170 = vunpack.c.h.b16 %v114
    %v171 = vunpack.c.l.b16 %v115
    %v172 = vunpack.c.l.b16 %v116
    %v173 = vunpack.c.h.b16 %v116
    %v174 = vunpack.c.l.b16 %v117
    %v175 = vunpack.c.l.b16 %v118
    %v176 = vunpack.c.h.b16 %v118
    %v177 = vunpack.c.l.b16 %v119
    %v178 = vunpack.c.l.b16 %v120
    %v179 = vunpack.c.h.b16 %v120
    %v180 = vunpack.c.l.b16 %v121
    %v181 = vunpack.c.l.b16 %v122
    %v182 = vunpack.c.h.b16 %v122
    %v183 = vunpack.c.l.b16 %v123
    %v184 = vunpack.c.l.b16 %v124
    %v185 = vunpack.c.h.b16 %v124
    %v186 = vunpack.c.l.b16 %v125
    %v187 = vunpack.c.l.b16 %v126
    %v188 = vunpack.c.h.b16 %v126
    %v189 = vunpack.c.l.b16 %v127
    %v190 = vunpack.c.l.b16 %v128
    %v191 = vunpack.c.h.b16 %v128
    %v192 = vunpack.c.l.b16 %v129
    %v193 = vunpack.c.l.b16 %v130
    %v194 = vunpack.c.h.b16 %v130
    %v195 = vunpack.c.l.b16 %v131
    %v196 = vunpack.c.l.b16 %v132
    %v197 = vunpack.c.h.b16 %v132
    %v198 = vunpack.c.l.b16 %v133
    %v199 = vpack.c.b16 %v163, %v160
    %v200 = vpack.c.b16 %v164, %v161
    %v201 = vpack.c.b16 %v165, %v162
    %v202 = vpack.c.b16 %v169, %v166
    %v203 = vpack.c.b16 %v170, %v167
    %v204 = vpack.c.b16 %v171, %v168
    %v205 = vpack.c.b16 %v175, %v172
    %v206 = vpack.c.b16 %v176, %v173
    %v207 = vpack.c.b16 %v177, %v174
    %v208 = vpack.c.b16 %v181, %v178
    %v209 = vpack.c.b16 %v182, %v179
    %v210 = vpack.c.b16 %v183, %v180
    %v211 = vpack.c.b16 %v187, %v184
    %v212 = vpack.c.b16 %v188, %v185
    %v213 = vpack.c.b16 %v189, %v186
    %v214 = vpack.c.b16 %v193, %v190
    %v215 = vpack.c.b16 %v194, %v191
    %v216 = vpack.c.b16 %v195, %v192
    %v217 = vpack.c.b16 %v196, %v196
    %v218 = vpack.c.b16 %v197, %v197
    %v219 = vpack.c.b16 %v198, %v198
    %vm238 = vcmask 818176
    %v240 = vsel %vm238, %v105, 0
    %v243 = vsel %vm238, %v106, 0
    %v246 = vsel %vm238, %v107, 0
    %vm248 = vcmask 1041408
    %v250 = vsel %vm248, %v217, 0
    %v253 = vsel %vm248, %v218, 0
    %v256 = vsel %vm248, %v219, 0
    %258 = vmatprep.subr.bf16.mxu0 %v200
    %259 = vmatpush1.bf16.msra.mxu0 %v199
    %260 = vmatprep.subr.bf16.mxu0 %v203
    %261 = vmatpush1.bf16.msra.mxu0 %v202
    %262 = vmatprep.subr.bf16.mxu0 %v206
    %263 = vmatpush1.bf16.msra.mxu0 %v205
    %264 = vmatprep.subr.bf16.mxu0 %v209
    %265 = vmatpush1.bf16.msra.mxu0 %v208
    %266 = vmatprep.subr.bf16.mxu0 %v212
    %267 = vmatpush1.bf16.msra.mxu0 %v211
    %268 = vmatprep.subr.bf16.mxu0 %v215
    %269 = vmatpush1.bf16.msra.mxu0 %v214
    %270 = vmatprep.subr.bf16.mxu0 %v253
    %271 = vmatpush1.bf16.msra.mxu0 %v250
    %272 = vmatprep.subr.bf16.mxu0 0
    %273 = vmatpush1.bf16.msra.mxu0 0
    %274 = vmatprep.subr.bf16.mxu0 0
    %275 = vmatpush1.bf16.msra.mxu0 0
    %276 = vmatprep.subr.bf16.mxu0 0
    %277 = vmatpush1.bf16.msra.mxu0 0
    %278 = vmatprep.subr.bf16.mxu0 0
    %279 = vmatpush1.bf16.msra.mxu0 0
    %280 = vmatprep.subr.bf16.mxu0 0
    %281 = vmatpush1.bf16.msra.mxu0 0
    %282 = vmatprep.subr.bf16.mxu0 0
    %283 = vmatpush1.bf16.msra.mxu0 0
    %284 = vmatprep.subr.bf16.mxu0 0
    %285 = vmatpush1.bf16.msra.mxu0 0
    %286 = vmatprep.subr.bf16.mxu0 0
    %287 = vmatpush1.bf16.msra.mxu0 0
    %288 = vmatprep.subr.bf16.mxu0 0
    %289 = vmatpush1.bf16.msra.mxu0 0
    %290 = vmatprep.mubr.bf16.mxu0 0
    %291 = vmatmul.mubr.bf16.gmra.mrb[0].mxu0 %v240
    %v292 = vpop.f32.mrb[0].mxu0
    %v293 = vadd.f32 0.0, %v292
    %v294 = vpop.f32.mrb[0].mxu0
    %v295 = vadd.f32 0.0, %v294
    %v296 = vpop.f32.mrb[0].mxu0
    %v297 = vadd.f32 0.0, %v296
    %v298 = vpop.f32.mrb[0].mxu0
    %v299 = vadd.f32 0.0, %v298
    %300 = vmatprep.mubr.bf16.mxu0 0
    %301 = vmatmul.mubr.bf16.gmra.mrb[0].mxu0 %v243
    %v302 = vpop.f32.mrb[0].mxu0
    %v303 = vadd.f32 0.0, %v302
    %v304 = vpop.f32.mrb[0].mxu0
    %v305 = vadd.f32 0.0, %v304
    %v306 = vpop.f32.mrb[0].mxu0
    %v307 = vadd.f32 0.0, %v306
    %v308 = vpop.f32.mrb[0].mxu0
    %v309 = vadd.f32 0.0, %v308
    %310 = vmatprep.mubr.bf16.mxu0 0
    %311 = vmatmul.mubr.bf16.gmra.mrb[0].mxu0 %v246
    %v312 = vpop.f32.mrb[0].mxu0
    %v313 = vadd.f32 0.0, %v312
    %v314 = vpop.f32.mrb[0].mxu0
    %v315 = vadd.f32 0.0, %v314
    %v316 = vpop.f32.mrb[0].mxu0
    %v317 = vadd.f32 0.0, %v316
    %v318 = vpop.f32.mrb[0].mxu0
    %v319 = vadd.f32 0.0, %v318
    %320 = vdwg.mxu0
    %321 = vmatprep.subr.bf16.mxu0 0
    %322 = vmatpush1.bf16.msra.mxu0 %v201
    %323 = vmatprep.subr.bf16.mxu0 0
    %324 = vmatpush1.bf16.msra.mxu0 %v204
    %325 = vmatprep.subr.bf16.mxu0 0
    %326 = vmatpush1.bf16.msra.mxu0 %v207
    %327 = vmatprep.subr.bf16.mxu0 0
    %328 = vmatpush1.bf16.msra.mxu0 %v210
    %329 = vmatprep.subr.bf16.mxu0 0
    %330 = vmatpush1.bf16.msra.mxu0 %v213
    %331 = vmatprep.subr.bf16.mxu0 0
    %332 = vmatpush1.bf16.msra.mxu0 %v216
    %333 = vmatprep.subr.bf16.mxu0 0
    %334 = vmatpush1.bf16.msra.mxu0 %v256
    %335 = vmatprep.subr.bf16.mxu0 0
    %336 = vmatpush1.bf16.msra.mxu0 0
    %337 = vmatprep.subr.bf16.mxu0 0
    %338 = vmatpush1.bf16.msra.mxu0 0
    %339 = vmatprep.subr.bf16.mxu0 0
    %340 = vmatpush1.bf16.msra.mxu0 0
    %341 = vmatprep.subr.bf16.mxu0 0
    %342 = vmatpush1.bf16.msra.mxu0 0
    %343 = vmatprep.subr.bf16.mxu0 0
    %344 = vmatpush1.bf16.msra.mxu0 0
    %345 = vmatprep.subr.bf16.mxu0 0
    %346 = vmatpush1.bf16.msra.mxu0 0
    %347 = vmatprep.subr.bf16.mxu0 0
    %348 = vmatpush1.bf16.msra.mxu0 0
    %349 = vmatprep.subr.bf16.mxu0 0
    %350 = vmatpush1.bf16.msra.mxu0 0
    %351 = vmatprep.subr.bf16.mxu0 0
    %352 = vmatpush1.bf16.msra.mxu0 0
    %353 = vmatprep.mubr.bf16.mxu0 0
    %354 = vmatmul.mubr.bf16.gmra.mrb[0].mxu0 %v240
    %v355 = vpop.f32.mrb[0].mxu0
    %v356 = vadd.f32 0.0, %v355
    %v357 = vpop.f32.mrb[0].mxu0
    %v358 = vpop.f32.mrb[0].mxu0
    %v359 = vadd.f32 0.0, %v358
    %v360 = vpop.f32.mrb[0].mxu0
    %361 = vmatprep.mubr.bf16.mxu0 0
    %362 = vmatmul.mubr.bf16.gmra.mrb[0].mxu0 %v243
    %v363 = vpop.f32.mrb[0].mxu0
    %v364 = vadd.f32 0.0, %v363
    %v365 = vpop.f32.mrb[0].mxu0
    %v366 = vpop.f32.mrb[0].mxu0
    %v367 = vadd.f32 0.0, %v366
    %v368 = vpop.f32.mrb[0].mxu0
    %369 = vmatprep.mubr.bf16.mxu0 0
    %370 = vmatmul.mubr.bf16.gmra.mrb[0].mxu0 %v246
    %v371 = vpop.f32.mrb[0].mxu0
    %v372 = vadd.f32 0.0, %v371
    %v373 = vpop.f32.mrb[0].mxu0
    %v374 = vpop.f32.mrb[0].mxu0
    %v375 = vadd.f32 0.0, %v374
    %v376 = vpop.f32.mrb[0].mxu0
    %377 = vdwg.mxu0
    %v378 = vlaneseq
    %v379 = vshrl.u32 %v378, 7
    %vm380 = vcmp.lt.s32.totalorder %v379, 2
    %v381 = vld [vmem:[%s4] ss:$8 sm:$0x7]
    %s382 = scalar_lea.vmem %s4, 1
    %v383 = vld [vmem:[%s382] ss:$8 sm:$0x7]
    %v384 = vsel %vm380, 1, 0
    %vm385 = vcmp.eq.s32.totalorder %v384, 1
    %v387 = vlaneseq
    %v388 = vshrl.u32 %v387, 7
    %v389 = vsub.s32 0, %v388
    %v390 = vrot.slane %v381, %v389
    %v391 = vlaneseq
    %v392 = vshrl.u32 %v391, 7
    %v393 = vsub.s32 1, %v392
    %v394 = vrot.slane %v381, %v393
    %v395 = vlaneseq
    %v396 = vshrl.u32 %v395, 7
    %v397 = vsub.s32 2, %v396
    %v398 = vrot.slane %v381, %v397
    %v403 = vlaneseq
    %v404 = vshrl.u32 %v403, 7
    %v405 = vsub.s32 0, %v404
    %v406 = vrot.slane %v383, %v405
    %v407 = vlaneseq
    %v408 = vshrl.u32 %v407, 7
    %v409 = vsub.s32 1, %v408
    %v410 = vrot.slane %v383, %v409
    %v411 = vlaneseq
    %v412 = vshrl.u32 %v411, 7
    %v413 = vsub.s32 2, %v412
    %v414 = vrot.slane %v383, %v413
    %v418 = vsel %vm385, %v390, %v406
    %v419 = vsel %vm385, %v394, %v410
    %v420 = vsel %vm385, %v398, %v414
    %vm421 = vcmp.lt.s32.totalorder %v68, 32
    %v422 = vld [vmem:[#allocation2] sm:$0x3]
    %v423 = vsel %vm421, %v422, 0.0
    %v424 = vpack.c.bf16 %v423, %v423
    %v425 = vld [vmem:[#allocation7 + $0x24] sm:$0xff]
    %v426 = vld [vmem:[#allocation7 + $0x2c] sm:$0xf]
    %v427 = vld [vmem:[#allocation7 + $0x58] sm:$0xff]
    %v428 = vld [vmem:[#allocation7 + $0x60] sm:$0xf]
    %v429 = vld [vmem:[#allocation7 + $0x8c] sm:$0xff]
    %v430 = vld [vmem:[#allocation7 + $0x94] sm:$0xf]
    %v431 = vld [vmem:[#allocation7 + $0xc0] sm:$0xff]
    %v432 = vld [vmem:[#allocation7 + $0xc8] sm:$0xf]
    %v433 = vld [vmem:[#allocation7 + $0xf4] sm:$0xff]
    %v434 = vld [vmem:[#allocation7 + $0xfc] sm:$0xf]
    %v435 = vld [vmem:[#allocation7 + $0x128] sm:$0xff]
    %v436 = vld [vmem:[#allocation7 + $0x130] sm:$0xf]
    %v437 = vld [vmem:[#allocation7 + $0x15c] sm:$0xff]
    %v438 = vld [vmem:[#allocation7 + $0x164] sm:$0xf]
    %v439 = vld [vmem:[#allocation7 + $0x190] sm:$0xff]
    %v440 = vld [vmem:[#allocation7 + $0x198] sm:$0xf]
    %v441 = vld [vmem:[#allocation7 + $0x1c4] sm:$0xff]
    %v442 = vld [vmem:[#allocation7 + $0x1cc] sm:$0xf]
    %v443 = vld [vmem:[#allocation7 + $0x1f8] sm:$0xff]
    %v444 = vld [vmem:[#allocation7 + $0x200] sm:$0xf]
    %v445 = vld [vmem:[#allocation7 + $0x22c] sm:$0xff]
    %v446 = vld [vmem:[#allocation7 + $0x234] sm:$0xf]
    %v447 = vld [vmem:[#allocation7 + $0x260] sm:$0xff]
    %v448 = vld [vmem:[#allocation7 + $0x268] sm:$0xf]
    %v449 = vld [vmem:[#allocation7 + $0x294] sm:$0xff]
    %v450 = vld [vmem:[#allocation7 + $0x29c] sm:$0xf]
    %v451 = vld [vmem:[#allocation7 + $0x2c8] sm:$0xff]
    %v452 = vld [vmem:[#allocation7 + $0x2d0] sm:$0xf]
    %v453 = vld [vmem:[#allocation7 + $0x2fc] sm:$0xff]
    %v454 = vld [vmem:[#allocation7 + $0x304] sm:$0xf]
    %v455 = vld [vmem:[#allocation7 + $0x330] sm:$0xff]
    %v456 = vld [vmem:[#allocation7 + $0x338] sm:$0xf]
    %s457 = scalar_lea.vmem %s4, 3
    %v458 = vld [vmem:[%s457] ss:$8 sm:$0x7]
    %v460 = vlaneseq
    %v461 = vshrl.u32 %v460, 7
    %v462 = vsub.s32 0, %v461
    %v463 = vrot.slane %v458, %v462
    %v464 = vlaneseq
    %v465 = vshrl.u32 %v464, 7
    %v466 = vsub.s32 1, %v465
    %v467 = vrot.slane %v458, %v466
    %v468 = vlaneseq
    %v469 = vshrl.u32 %v468, 7
    %v470 = vsub.s32 2, %v469
    %v471 = vrot.slane %v458, %v470
    %v507 = vunpack.c.l.b16 %v425
    %v508 = vunpack.c.h.b16 %v425
    %v509 = vunpack.c.l.b16 %v426
    %v510 = vunpack.c.l.b16 %v427
    %v511 = vunpack.c.h.b16 %v427
    %v512 = vunpack.c.l.b16 %v428
    %v513 = vunpack.c.l.b16 %v429
    %v514 = vunpack.c.h.b16 %v429
    %v515 = vunpack.c.l.b16 %v430
    %v516 = vunpack.c.l.b16 %v431
    %v517 = vunpack.c.h.b16 %v431
    %v518 = vunpack.c.l.b16 %v432
    %v519 = vunpack.c.l.b16 %v433
    %v520 = vunpack.c.h.b16 %v433
    %v521 = vunpack.c.l.b16 %v434
    %v522 = vunpack.c.l.b16 %v435
    %v523 = vunpack.c.h.b16 %v435
    %v524 = vunpack.c.l.b16 %v436
    %v525 = vunpack.c.l.b16 %v437
    %v526 = vunpack.c.h.b16 %v437
    %v527 = vunpack.c.l.b16 %v438
    %v528 = vunpack.c.l.b16 %v439
    %v529 = vunpack.c.h.b16 %v439
    %v530 = vunpack.c.l.b16 %v440
    %v531 = vunpack.c.l.b16 %v441
    %v532 = vunpack.c.h.b16 %v441
    %v533 = vunpack.c.l.b16 %v442
    %v534 = vunpack.c.l.b16 %v443
    %v535 = vunpack.c.h.b16 %v443
    %v536 = vunpack.c.l.b16 %v444
    %v537 = vunpack.c.l.b16 %v445
    %v538 = vunpack.c.h.b16 %v445
    %v539 = vunpack.c.l.b16 %v446
    %v540 = vunpack.c.l.b16 %v447
    %v541 = vunpack.c.h.b16 %v447
    %v542 = vunpack.c.l.b16 %v448
    %v543 = vunpack.c.l.b16 %v449
    %v544 = vunpack.c.h.b16 %v449
    %v545 = vunpack.c.l.b16 %v450
    %v546 = vunpack.c.l.b16 %v451
    %v547 = vunpack.c.h.b16 %v451
    %v548 = vunpack.c.l.b16 %v452
    %v549 = vunpack.c.l.b16 %v453
    %v550 = vunpack.c.h.b16 %v453
    %v551 = vunpack.c.l.b16 %v454
    %v552 = vunpack.c.l.b16 %v455
    %v553 = vunpack.c.h.b16 %v455
    %v554 = vunpack.c.l.b16 %v456
    %v555 = vpack.c.b16 %v510, %v507
    %v556 = vpack.c.b16 %v511, %v508
    %v557 = vpack.c.b16 %v512, %v509
    %v558 = vpack.c.b16 %v516, %v513
    %v559 = vpack.c.b16 %v517, %v514
    %v560 = vpack.c.b16 %v518, %v515
    %v561 = vpack.c.b16 %v522, %v519
    %v562 = vpack.c.b16 %v523, %v520
    %v563 = vpack.c.b16 %v524, %v521
    %v564 = vpack.c.b16 %v528, %v525
    %v565 = vpack.c.b16 %v529, %v526
    %v566 = vpack.c.b16 %v530, %v527
    %v567 = vpack.c.b16 %v534, %v531
    %v568 = vpack.c.b16 %v535, %v532
    %v569 = vpack.c.b16 %v536, %v533
    %v570 = vpack.c.b16 %v540, %v537
    %v571 = vpack.c.b16 %v541, %v538
    %v572 = vpack.c.b16 %v542, %v539
    %v573 = vpack.c.b16 %v546, %v543
    %v574 = vpack.c.b16 %v547, %v544
    %v575 = vpack.c.b16 %v548, %v545
    %v576 = vpack.c.b16 %v552, %v549
    %v577 = vpack.c.b16 %v553, %v550
    %v578 = vpack.c.b16 %v554, %v551
    %603 = vmatprep.subr.bf16.mxu0 %v556
    %604 = vmatpush1.bf16.msra.mxu0 %v555
    %605 = vmatprep.subr.bf16.mxu0 %v559
    %606 = vmatpush1.bf16.msra.mxu0 %v558
    %607 = vmatprep.subr.bf16.mxu0 %v562
    %608 = vmatpush1.bf16.msra.mxu0 %v561
    %609 = vmatprep.subr.bf16.mxu0 %v565
    %610 = vmatpush1.bf16.msra.mxu0 %v564
    %611 = vmatprep.subr.bf16.mxu0 %v568
    %612 = vmatpush1.bf16.msra.mxu0 %v567
    %613 = vmatprep.subr.bf16.mxu0 %v571
    %614 = vmatpush1.bf16.msra.mxu0 %v570
    %615 = vmatprep.subr.bf16.mxu0 %v574
    %616 = vmatpush1.bf16.msra.mxu0 %v573
    %617 = vmatprep.subr.bf16.mxu0 %v577
    %618 = vmatpush1.bf16.msra.mxu0 %v576
    %619 = vmatprep.subr.bf16.mxu0 0
    %620 = vmatpush1.bf16.msra.mxu0 0
    %621 = vmatprep.subr.bf16.mxu0 0
    %622 = vmatpush1.bf16.msra.mxu0 0
    %623 = vmatprep.subr.bf16.mxu0 0
    %624 = vmatpush1.bf16.msra.mxu0 0
    %625 = vmatprep.subr.bf16.mxu0 0
    %626 = vmatpush1.bf16.msra.mxu0 0
    %627 = vmatprep.subr.bf16.mxu0 0
    %628 = vmatpush1.bf16.msra.mxu0 0
    %629 = vmatprep.subr.bf16.mxu0 0
    %630 = vmatpush1.bf16.msra.mxu0 0
    %631 = vmatprep.subr.bf16.mxu0 0
    %632 = vmatpush1.bf16.msra.mxu0 0
    %633 = vmatprep.subr.bf16.mxu0 0
    %634 = vmatpush1.bf16.msra.mxu0 0
    %635 = vmatprep.mubr.bf16.mxu0 0
    %636 = vmatmul.mubr.bf16.gmra.mrb[0].mxu0 %v424
    %v637 = vpop.f32.mrb[0].mxu0
    %v638 = vadd.f32 %v463, %v637
    %v639 = vpop.f32.mrb[0].mxu0
    %v640 = vadd.f32 %v467, %v639
    %v641 = vpop.f32.mrb[0].mxu0
    %v642 = vpop.f32.mrb[0].mxu0
    %643 = vdwg.mxu0
    %644 = vmatprep.subr.bf16.mxu0 0
    %645 = vmatpush1.bf16.msra.mxu0 %v557
    %646 = vmatprep.subr.bf16.mxu0 0
    %647 = vmatpush1.bf16.msra.mxu0 %v560
    %648 = vmatprep.subr.bf16.mxu0 0
    %649 = vmatpush1.bf16.msra.mxu0 %v563
    %650 = vmatprep.subr.bf16.mxu0 0
    %651 = vmatpush1.bf16.msra.mxu0 %v566
    %652 = vmatprep.subr.bf16.mxu0 0
    %653 = vmatpush1.bf16.msra.mxu0 %v569
    %654 = vmatprep.subr.bf16.mxu0 0
    %655 = vmatpush1.bf16.msra.mxu0 %v572
    %656 = vmatprep.subr.bf16.mxu0 0
    %657 = vmatpush1.bf16.msra.mxu0 %v575
    %658 = vmatprep.subr.bf16.mxu0 0
    %659 = vmatpush1.bf16.msra.mxu0 %v578
    %660 = vmatprep.subr.bf16.mxu0 0
    %661 = vmatpush1.bf16.msra.mxu0 0
    %662 = vmatprep.subr.bf16.mxu0 0
    %663 = vmatpush1.bf16.msra.mxu0 0
    %664 = vmatprep.subr.bf16.mxu0 0
    %665 = vmatpush1.bf16.msra.mxu0 0
    %666 = vmatprep.subr.bf16.mxu0 0
    %667 = vmatpush1.bf16.msra.mxu0 0
    %668 = vmatprep.subr.bf16.mxu0 0
    %669 = vmatpush1.bf16.msra.mxu0 0
    %670 = vmatprep.subr.bf16.mxu0 0
    %671 = vmatpush1.bf16.msra.mxu0 0
    %672 = vmatprep.subr.bf16.mxu0 0
    %673 = vmatpush1.bf16.msra.mxu0 0
    %674 = vmatprep.subr.bf16.mxu0 0
    %675 = vmatpush1.bf16.msra.mxu0 0
    %676 = vmatprep.mubr.bf16.mxu0 0
    %677 = vmatmul.mubr.bf16.gmra.mrb[0].mxu0 %v424
    %v678 = vpop.f32.mrb[0].mxu0
    %v679 = vadd.f32 %v471, %v678
    %v680 = vpop.f32.mrb[0].mxu0
    %v681 = vpop.f32.mrb[0].mxu0
    %v682 = vpop.f32.mrb[0].mxu0
    %683 = vdwg.mxu0
    %v684 = vld [vmem:[#allocation7] sm:$0xff]
    %v685 = vld [vmem:[#allocation7 + $0x8] sm:$0xff]
    %v686 = vld [vmem:[#allocation7 + $0x10] sm:$0xff]
    %v687 = vld [vmem:[#allocation7 + $0x34] sm:$0xff]
    %v688 = vld [vmem:[#allocation7 + $0x3c] sm:$0xff]
    %v689 = vld [vmem:[#allocation7 + $0x44] sm:$0xff]
    %v690 = vld [vmem:[#allocation7 + $0x68] sm:$0xff]
    %v691 = vld [vmem:[#allocation7 + $0x70] sm:$0xff]
    %v692 = vld [vmem:[#allocation7 + $0x78] sm:$0xff]
    %v693 = vld [vmem:[#allocation7 + $0x9c] sm:$0xff]
    %v694 = vld [vmem:[#allocation7 + $0xa4] sm:$0xff]
    %v695 = vld [vmem:[#allocation7 + $0xac] sm:$0xff]
    %v696 = vld [vmem:[#allocation7 + $0xd0] sm:$0xff]
    %v697 = vld [vmem:[#allocation7 + $0xd8] sm:$0xff]
    %v698 = vld [vmem:[#allocation7 + $0xe0] sm:$0xff]
    %v699 = vld [vmem:[#allocation7 + $0x104] sm:$0xff]
    %v700 = vld [vmem:[#allocation7 + $0x10c] sm:$0xff]
    %v701 = vld [vmem:[#allocation7 + $0x114] sm:$0xff]
    %v702 = vld [vmem:[#allocation7 + $0x138] sm:$0xff]
    %v703 = vld [vmem:[#allocation7 + $0x140] sm:$0xff]
    %v704 = vld [vmem:[#allocation7 + $0x148] sm:$0xff]
    %v705 = vld [vmem:[#allocation7 + $0x16c] sm:$0xff]
    %v706 = vld [vmem:[#allocation7 + $0x174] sm:$0xff]
    %v707 = vld [vmem:[#allocation7 + $0x17c] sm:$0xff]
    %v708 = vld [vmem:[#allocation7 + $0x1a0] sm:$0xff]
    %v709 = vld [vmem:[#allocation7 + $0x1a8] sm:$0xff]
    %v710 = vld [vmem:[#allocation7 + $0x1b0] sm:$0xff]
    %v711 = vld [vmem:[#allocation7 + $0x1d4] sm:$0xff]
    %v712 = vld [vmem:[#allocation7 + $0x1dc] sm:$0xff]
    %v713 = vld [vmem:[#allocation7 + $0x1e4] sm:$0xff]
    %v714 = vld [vmem:[#allocation7 + $0x208] sm:$0xff]
    %v715 = vld [vmem:[#allocation7 + $0x210] sm:$0xff]
    %v716 = vld [vmem:[#allocation7 + $0x218] sm:$0xff]
    %v717 = vld [vmem:[#allocation7 + $0x23c] sm:$0xff]
    %v718 = vld [vmem:[#allocation7 + $0x244] sm:$0xff]
    %v719 = vld [vmem:[#allocation7 + $0x24c] sm:$0xff]
    %v720 = vld [vmem:[#allocation7 + $0x270] sm:$0xff]
    %v721 = vld [vmem:[#allocation7 + $0x278] sm:$0xff]
    %v722 = vld [vmem:[#allocation7 + $0x280] sm:$0xff]
    %v723 = vld [vmem:[#allocation7 + $0x2a4] sm:$0xff]
    %v724 = vld [vmem:[#allocation7 + $0x2ac] sm:$0xff]
    %v725 = vld [vmem:[#allocation7 + $0x2b4] sm:$0xff]
    %v726 = vld [vmem:[#allocation7 + $0x2d8] sm:$0xff]
    %v727 = vld [vmem:[#allocation7 + $0x2e0] sm:$0xff]
    %v728 = vld [vmem:[#allocation7 + $0x2e8] sm:$0xff]
    %v729 = vld [vmem:[#allocation7 + $0x30c] sm:$0xff]
    %v730 = vld [vmem:[#allocation7 + $0x314] sm:$0xff]
    %v731 = vld [vmem:[#allocation7 + $0x31c] sm:$0xff]
    %v780 = vunpack.c.l.b16 %v684
    %v781 = vunpack.c.h.b16 %v684
    %v782 = vunpack.c.l.b16 %v685
    %v783 = vunpack.c.h.b16 %v685
    %v784 = vunpack.c.l.b16 %v686
    %v785 = vunpack.c.h.b16 %v686
    %v786 = vunpack.c.l.b16 %v687
    %v787 = vunpack.c.h.b16 %v687
    %v788 = vunpack.c.l.b16 %v688
    %v789 = vunpack.c.h.b16 %v688
    %v790 = vunpack.c.l.b16 %v689
    %v791 = vunpack.c.h.b16 %v689
    %v792 = vunpack.c.l.b16 %v690
    %v793 = vunpack.c.h.b16 %v690
    %v794 = vunpack.c.l.b16 %v691
    %v795 = vunpack.c.h.b16 %v691
    %v796 = vunpack.c.l.b16 %v692
    %v797 = vunpack.c.h.b16 %v692
    %v798 = vunpack.c.l.b16 %v693
    %v799 = vunpack.c.h.b16 %v693
    %v800 = vunpack.c.l.b16 %v694
    %v801 = vunpack.c.h.b16 %v694
    %v802 = vunpack.c.l.b16 %v695
    %v803 = vunpack.c.h.b16 %v695
    %v804 = vunpack.c.l.b16 %v696
    %v805 = vunpack.c.h.b16 %v696
    %v806 = vunpack.c.l.b16 %v697
    %v807 = vunpack.c.h.b16 %v697
    %v808 = vunpack.c.l.b16 %v698
    %v809 = vunpack.c.h.b16 %v698
    %v810 = vunpack.c.l.b16 %v699
    %v811 = vunpack.c.h.b16 %v699
    %v812 = vunpack.c.l.b16 %v700
    %v813 = vunpack.c.h.b16 %v700
    %v814 = vunpack.c.l.b16 %v701
    %v815 = vunpack.c.h.b16 %v701
    %v816 = vunpack.c.l.b16 %v702
    %v817 = vunpack.c.h.b16 %v702
    %v818 = vunpack.c.l.b16 %v703
    %v819 = vunpack.c.h.b16 %v703
    %v820 = vunpack.c.l.b16 %v704
    %v821 = vunpack.c.h.b16 %v704
    %v822 = vunpack.c.l.b16 %v705
    %v823 = vunpack.c.h.b16 %v705
    %v824 = vunpack.c.l.b16 %v706
    %v825 = vunpack.c.h.b16 %v706
    %v826 = vunpack.c.l.b16 %v707
    %v827 = vunpack.c.h.b16 %v707
    %v828 = vunpack.c.l.b16 %v708
    %v829 = vunpack.c.h.b16 %v708
    %v830 = vunpack.c.l.b16 %v709
    %v831 = vunpack.c.h.b16 %v709
    %v832 = vunpack.c.l.b16 %v710
    %v833 = vunpack.c.h.b16 %v710
    %v834 = vunpack.c.l.b16 %v711
    %v835 = vunpack.c.h.b16 %v711
    %v836 = vunpack.c.l.b16 %v712
    %v837 = vunpack.c.h.b16 %v712
    %v838 = vunpack.c.l.b16 %v713
    %v839 = vunpack.c.h.b16 %v713
    %v840 = vunpack.c.l.b16 %v714
    %v841 = vunpack.c.h.b16 %v714
    %v842 = vunpack.c.l.b16 %v715
    %v843 = vunpack.c.h.b16 %v715
    %v844 = vunpack.c.l.b16 %v716
    %v845 = vunpack.c.h.b16 %v716
    %v846 = vunpack.c.l.b16 %v717
    %v847 = vunpack.c.h.b16 %v717
    %v848 = vunpack.c.l.b16 %v718
    %v849 = vunpack.c.h.b16 %v718
    %v850 = vunpack.c.l.b16 %v719
    %v851 = vunpack.c.h.b16 %v719
    %v852 = vunpack.c.l.b16 %v720
    %v853 = vunpack.c.h.b16 %v720
    %v854 = vunpack.c.l.b16 %v721
    %v855 = vunpack.c.h.b16 %v721
    %v856 = vunpack.c.l.b16 %v722
    %v857 = vunpack.c.h.b16 %v722
    %v858 = vunpack.c.l.b16 %v723
    %v859 = vunpack.c.h.b16 %v723
    %v860 = vunpack.c.l.b16 %v724
    %v861 = vunpack.c.h.b16 %v724
    %v862 = vunpack.c.l.b16 %v725
    %v863 = vunpack.c.h.b16 %v725
    %v864 = vunpack.c.l.b16 %v726
    %v865 = vunpack.c.h.b16 %v726
    %v866 = vunpack.c.l.b16 %v727
    %v867 = vunpack.c.h.b16 %v727
    %v868 = vunpack.c.l.b16 %v728
    %v869 = vunpack.c.h.b16 %v728
    %v870 = vunpack.c.l.b16 %v729
    %v871 = vunpack.c.h.b16 %v729
    %v872 = vunpack.c.l.b16 %v730
    %v873 = vunpack.c.h.b16 %v730
    %v874 = vunpack.c.l.b16 %v731
    %v875 = vunpack.c.h.b16 %v731
    %v876 = vpack.c.b16 %v786, %v780
    %v877 = vpack.c.b16 %v787, %v781
    %v878 = vpack.c.b16 %v788, %v782
    %v879 = vpack.c.b16 %v789, %v783
    %v880 = vpack.c.b16 %v790, %v784
    %v881 = vpack.c.b16 %v791, %v785
    %v882 = vpack.c.b16 %v798, %v792
    %v883 = vpack.c.b16 %v799, %v793
    %v884 = vpack.c.b16 %v800, %v794
    %v885 = vpack.c.b16 %v801, %v795
    %v886 = vpack.c.b16 %v802, %v796
    %v887 = vpack.c.b16 %v803, %v797
    %v888 = vpack.c.b16 %v810, %v804
    %v889 = vpack.c.b16 %v811, %v805
    %v890 = vpack.c.b16 %v812, %v806
    %v891 = vpack.c.b16 %v813, %v807
    %v892 = vpack.c.b16 %v814, %v808
    %v893 = vpack.c.b16 %v815, %v809
    %v894 = vpack.c.b16 %v822, %v816
    %v895 = vpack.c.b16 %v823, %v817
    %v896 = vpack.c.b16 %v824, %v818
    %v897 = vpack.c.b16 %v825, %v819
    %v898 = vpack.c.b16 %v826, %v820
    %v899 = vpack.c.b16 %v827, %v821
    %v900 = vpack.c.b16 %v834, %v828
    %v901 = vpack.c.b16 %v835, %v829
    %v902 = vpack.c.b16 %v836, %v830
    %v903 = vpack.c.b16 %v837, %v831
    %v904 = vpack.c.b16 %v838, %v832
    %v905 = vpack.c.b16 %v839, %v833
    %v906 = vpack.c.b16 %v846, %v840
    %v907 = vpack.c.b16 %v847, %v841
    %v908 = vpack.c.b16 %v848, %v842
    %v909 = vpack.c.b16 %v849, %v843
    %v910 = vpack.c.b16 %v850, %v844
    %v911 = vpack.c.b16 %v851, %v845
    %v912 = vpack.c.b16 %v858, %v852
    %v913 = vpack.c.b16 %v859, %v853
    %v914 = vpack.c.b16 %v860, %v854
    %v915 = vpack.c.b16 %v861, %v855
    %v916 = vpack.c.b16 %v862, %v856
    %v917 = vpack.c.b16 %v863, %v857
    %v918 = vpack.c.b16 %v870, %v864
    %v919 = vpack.c.b16 %v871, %v865
    %v920 = vpack.c.b16 %v872, %v866
    %v921 = vpack.c.b16 %v873, %v867
    %v922 = vpack.c.b16 %v874, %v868
    %v923 = vpack.c.b16 %v875, %v869
    %972 = vmatprep.subr.bf16.mxu0 %v877
    %973 = vmatpush1.bf16.msra.mxu0 %v876
    %974 = vmatprep.subr.bf16.mxu0 %v883
    %975 = vmatpush1.bf16.msra.mxu0 %v882
    %976 = vmatprep.subr.bf16.mxu0 %v889
    %977 = vmatpush1.bf16.msra.mxu0 %v888
    %978 = vmatprep.subr.bf16.mxu0 %v895
    %979 = vmatpush1.bf16.msra.mxu0 %v894
    %980 = vmatprep.subr.bf16.mxu0 %v901
    %981 = vmatpush1.bf16.msra.mxu0 %v900
    %982 = vmatprep.subr.bf16.mxu0 %v907
    %983 = vmatpush1.bf16.msra.mxu0 %v906
    %984 = vmatprep.subr.bf16.mxu0 %v913
    %985 = vmatpush1.bf16.msra.mxu0 %v912
    %986 = vmatprep.subr.bf16.mxu0 %v919
    %987 = vmatpush1.bf16.msra.mxu0 %v918
    %988 = vmatprep.subr.bf16.mxu0 0
    %989 = vmatpush1.bf16.msra.mxu0 0
    %990 = vmatprep.subr.bf16.mxu0 0
    %991 = vmatpush1.bf16.msra.mxu0 0
    %992 = vmatprep.subr.bf16.mxu0 0
    %993 = vmatpush1.bf16.msra.mxu0 0
    %994 = vmatprep.subr.bf16.mxu0 0
    %995 = vmatpush1.bf16.msra.mxu0 0
    %996 = vmatprep.subr.bf16.mxu0 0
    %997 = vmatpush1.bf16.msra.mxu0 0
    %998 = vmatprep.subr.bf16.mxu0 0
    %999 = vmatpush1.bf16.msra.mxu0 0
    %1000 = vmatprep.subr.bf16.mxu0 0
    %1001 = vmatpush1.bf16.msra.mxu0 0
    %1002 = vmatprep.subr.bf16.mxu0 0
    %1003 = vmatpush1.bf16.msra.mxu0 0
    %1004 = vmatprep.mubr.bf16.mxu0 0
    %1005 = vmatmul.mubr.bf16.gmra.mrb[0].mxu0 0
    %v1006 = vpop.f32.mrb[0].mxu0
    %v1007 = vadd.f32 0.0, %v1006
    %v1008 = vpop.f32.mrb[0].mxu0
    %v1009 = vadd.f32 0.0, %v1008
    %v1010 = vpop.f32.mrb[0].mxu0
    %v1011 = vpop.f32.mrb[0].mxu0
    %1012 = vdwg.mxu0
    %1013 = vmatprep.subr.bf16.mxu0 %v879
    %1014 = vmatpush1.bf16.msra.mxu0 %v878
    %1015 = vmatprep.subr.bf16.mxu0 %v885
    %1016 = vmatpush1.bf16.msra.mxu0 %v884
    %1017 = vmatprep.subr.bf16.mxu0 %v891
    %1018 = vmatpush1.bf16.msra.mxu0 %v890
    %1019 = vmatprep.subr.bf16.mxu0 %v897
    %1020 = vmatpush1.bf16.msra.mxu0 %v896
    %1021 = vmatprep.subr.bf16.mxu0 %v903
    %1022 = vmatpush1.bf16.msra.mxu0 %v902
    %1023 = vmatprep.subr.bf16.mxu0 %v909
    %1024 = vmatpush1.bf16.msra.mxu0 %v908
    %1025 = vmatprep.subr.bf16.mxu0 %v915
    %1026 = vmatpush1.bf16.msra.mxu0 %v914
    %1027 = vmatprep.subr.bf16.mxu0 %v921
    %1028 = vmatpush1.bf16.msra.mxu0 %v920
    %1029 = vmatprep.subr.bf16.mxu0 0
    %1030 = vmatpush1.bf16.msra.mxu0 0
    %1031 = vmatprep.subr.bf16.mxu0 0
    %1032 = vmatpush1.bf16.msra.mxu0 0
    %1033 = vmatprep.subr.bf16.mxu0 0
    %1034 = vmatpush1.bf16.msra.mxu0 0
    %1035 = vmatprep.subr.bf16.mxu0 0
    %1036 = vmatpush1.bf16.msra.mxu0 0
    %1037 = vmatprep.subr.bf16.mxu0 0
    %1038 = vmatpush1.bf16.msra.mxu0 0
    %1039 = vmatprep.subr.bf16.mxu0 0
    %1040 = vmatpush1.bf16.msra.mxu0 0
    %1041 = vmatprep.subr.bf16.mxu0 0
    %1042 = vmatpush1.bf16.msra.mxu0 0
    %1043 = vmatprep.subr.bf16.mxu0 0
    %1044 = vmatpush1.bf16.msra.mxu0 0
    %1045 = vmatprep.mubr.bf16.mxu0 0
    %1046 = vmatmul.mubr.bf16.gmra.mrb[0].mxu0 0
    %v1047 = vpop.f32.mrb[0].mxu0
    %v1048 = vadd.f32 0.0, %v1047
    %v1049 = vpop.f32.mrb[0].mxu0
    %v1050 = vadd.f32 0.0, %v1049
    %v1051 = vpop.f32.mrb[0].mxu0
    %v1052 = vpop.f32.mrb[0].mxu0
    %1053 = vdwg.mxu0
    %1054 = vmatprep.subr.bf16.mxu0 %v881
    %1055 = vmatpush1.bf16.msra.mxu0 %v880
    %1056 = vmatprep.subr.bf16.mxu0 %v887
    %1057 = vmatpush1.bf16.msra.mxu0 %v886
    %1058 = vmatprep.subr.bf16.mxu0 %v893
    %1059 = vmatpush1.bf16.msra.mxu0 %v892
    %1060 = vmatprep.subr.bf16.mxu0 %v899
    %1061 = vmatpush1.bf16.msra.mxu0 %v898
    %1062 = vmatprep.subr.bf16.mxu0 %v905
    %1063 = vmatpush1.bf16.msra.mxu0 %v904
    %1064 = vmatprep.subr.bf16.mxu0 %v911
    %1065 = vmatpush1.bf16.msra.mxu0 %v910
    %1066 = vmatprep.subr.bf16.mxu0 %v917
    %1067 = vmatpush1.bf16.msra.mxu0 %v916
    %1068 = vmatprep.subr.bf16.mxu0 %v923
    %1069 = vmatpush1.bf16.msra.mxu0 %v922
    %1070 = vmatprep.subr.bf16.mxu0 0
    %1071 = vmatpush1.bf16.msra.mxu0 0
    %1072 = vmatprep.subr.bf16.mxu0 0
    %1073 = vmatpush1.bf16.msra.mxu0 0
    %1074 = vmatprep.subr.bf16.mxu0 0
    %1075 = vmatpush1.bf16.msra.mxu0 0
    %1076 = vmatprep.subr.bf16.mxu0 0
    %1077 = vmatpush1.bf16.msra.mxu0 0
    %1078 = vmatprep.subr.bf16.mxu0 0
    %1079 = vmatpush1.bf16.msra.mxu0 0
    %1080 = vmatprep.subr.bf16.mxu0 0
    %1081 = vmatpush1.bf16.msra.mxu0 0
    %1082 = vmatprep.subr.bf16.mxu0 0
    %1083 = vmatpush1.bf16.msra.mxu0 0
    %1084 = vmatprep.subr.bf16.mxu0 0
    %1085 = vmatpush1.bf16.msra.mxu0 0
    %1086 = vmatprep.mubr.bf16.mxu0 0
    %1087 = vmatmul.mubr.bf16.gmra.mrb[0].mxu0 0
    %v1088 = vpop.f32.mrb[0].mxu0
    %v1089 = vadd.f32 0.0, %v1088
    %v1090 = vpop.f32.mrb[0].mxu0
    %v1091 = vadd.f32 0.0, %v1090
    %v1092 = vpop.f32.mrb[0].mxu0
    %v1093 = vpop.f32.mrb[0].mxu0
    %1094 = vdwg.mxu0
    %v1095 = vsel %vm385, %v1007, %v1050
    %v1096 = vsel %vm385, %v1009, %v1089
    %v1097 = vsel %vm385, %v1048, %v1091
    %v1098 = vadd.f32 %v1095, %v418
    %v1099 = vadd.f32 %v1096, %v419
    %v1100 = vadd.f32 %v1097, %v420
    %v1101 = vadd.f32 %v293, %v1098
    %v1102 = vadd.f32 %v295, %v1099
    %v1103 = vxor.u32 %v1101, 2147483648
    %v1104 = vxor.u32 %v1102, 2147483648
    %v1105 = vmul.f32 %v1103, 1.442695
    %v1106 = vpow.pop %v1105
    %v1107 = vmul.f32 %v1104, 1.442695
    %v1108 = vpow.pop %v1107
    %v1109 = vadd.f32 %v1106, 1.0
    %v1110 = vadd.f32 %v1108, 1.0
    %v1111 = vrcp.pop %v1109
    %v1112 = vmul.f32 1.0, %v1111
    %v1113 = vrcp.pop %v1110
    %v1114 = vmul.f32 1.0, %v1113
    %v1115 = vmul.f32 %v1112, %v1100
    %v1116 = vadd.f32 %v356, %v1115
    %v1117 = vtanh.pop %v1116
    %v1118 = vsub.f32 1.0, %v1114
    %v1119 = vmul.f32 %v1118, %v1117
    %v1120 = vmul.f32 %v1114, 0.0
    %v1121 = vadd.f32 %v1119, %v1120
    %v1122 = vpack.c.bf16 %v1121, %v1121
    %1123 = vmatprep.subr.bf16.mxu0 %v877
    %1124 = vmatpush1.bf16.msra.mxu0 %v876
    %1125 = vmatprep.subr.bf16.mxu0 %v883
    %1126 = vmatpush1.bf16.msra.mxu0 %v882
    %1127 = vmatprep.subr.bf16.mxu0 %v889
    %1128 = vmatpush1.bf16.msra.mxu0 %v888
    %1129 = vmatprep.subr.bf16.mxu0 %v895
    %1130 = vmatpush1.bf16.msra.mxu0 %v894
    %1131 = vmatprep.subr.bf16.mxu0 %v901
    %1132 = vmatpush1.bf16.msra.mxu0 %v900
    %1133 = vmatprep.subr.bf16.mxu0 %v907
    %1134 = vmatpush1.bf16.msra.mxu0 %v906
    %1135 = vmatprep.subr.bf16.mxu0 %v913
    %1136 = vmatpush1.bf16.msra.mxu0 %v912
    %1137 = vmatprep.subr.bf16.mxu0 %v919
    %1138 = vmatpush1.bf16.msra.mxu0 %v918
    %1139 = vmatprep.subr.bf16.mxu0 0
    %1140 = vmatpush1.bf16.msra.mxu0 0
    %1141 = vmatprep.subr.bf16.mxu0 0
    %1142 = vmatpush1.bf16.msra.mxu0 0
    %1143 = vmatprep.subr.bf16.mxu0 0
    %1144 = vmatpush1.bf16.msra.mxu0 0
    %1145 = vmatprep.subr.bf16.mxu0 0
    %1146 = vmatpush1.bf16.msra.mxu0 0
    %1147 = vmatprep.subr.bf16.mxu0 0
    %1148 = vmatpush1.bf16.msra.mxu0 0
    %1149 = vmatprep.subr.bf16.mxu0 0
    %1150 = vmatpush1.bf16.msra.mxu0 0
    %1151 = vmatprep.subr.bf16.mxu0 0
    %1152 = vmatpush1.bf16.msra.mxu0 0
    %1153 = vmatprep.subr.bf16.mxu0 0
    %1154 = vmatpush1.bf16.msra.mxu0 0
    %1155 = vmatprep.mubr.bf16.mxu0 0
    %1156 = vmatmul.mubr.bf16.gmra.mrb[0].mxu0 %v1122
    %v1157 = vpop.f32.mrb[0].mxu0
    %v1158 = vadd.f32 0.0, %v1157
    %v1159 = vpop.f32.mrb[0].mxu0
    %v1160 = vadd.f32 0.0, %v1159
    %v1161 = vpop.f32.mrb[0].mxu0
    %v1162 = vpop.f32.mrb[0].mxu0
    %1163 = vdwg.mxu0
    %1164 = vmatprep.subr.bf16.mxu0 %v879
    %1165 = vmatpush1.bf16.msra.mxu0 %v878
    %1166 = vmatprep.subr.bf16.mxu0 %v885
    %1167 = vmatpush1.bf16.msra.mxu0 %v884
    %1168 = vmatprep.subr.bf16.mxu0 %v891
    %1169 = vmatpush1.bf16.msra.mxu0 %v890
    %1170 = vmatprep.subr.bf16.mxu0 %v897
    %1171 = vmatpush1.bf16.msra.mxu0 %v896
    %1172 = vmatprep.subr.bf16.mxu0 %v903
    %1173 = vmatpush1.bf16.msra.mxu0 %v902
    %1174 = vmatprep.subr.bf16.mxu0 %v909
    %1175 = vmatpush1.bf16.msra.mxu0 %v908
    %1176 = vmatprep.subr.bf16.mxu0 %v915
    %1177 = vmatpush1.bf16.msra.mxu0 %v914
    %1178 = vmatprep.subr.bf16.mxu0 %v921
    %1179 = vmatpush1.bf16.msra.mxu0 %v920
    %1180 = vmatprep.subr.bf16.mxu0 0
    %1181 = vmatpush1.bf16.msra.mxu0 0
    %1182 = vmatprep.subr.bf16.mxu0 0
    %1183 = vmatpush1.bf16.msra.mxu0 0
    %1184 = vmatprep.subr.bf16.mxu0 0
    %1185 = vmatpush1.bf16.msra.mxu0 0
    %1186 = vmatprep.subr.bf16.mxu0 0
    %1187 = vmatpush1.bf16.msra.mxu0 0
    %1188 = vmatprep.subr.bf16.mxu0 0
    %1189 = vmatpush1.bf16.msra.mxu0 0
    %1190 = vmatprep.subr.bf16.mxu0 0
    %1191 = vmatpush1.bf16.msra.mxu0 0
    %1192 = vmatprep.subr.bf16.mxu0 0
    %1193 = vmatpush1.bf16.msra.mxu0 0
    %1194 = vmatprep.subr.bf16.mxu0 0
    %1195 = vmatpush1.bf16.msra.mxu0 0
    %1196 = vmatprep.mubr.bf16.mxu0 0
    %1197 = vmatmul.mubr.bf16.gmra.mrb[0].mxu0 %v1122
    %v1198 = vpop.f32.mrb[0].mxu0
    %v1199 = vadd.f32 0.0, %v1198
    %v1200 = vpop.f32.mrb[0].mxu0
    %v1201 = vadd.f32 0.0, %v1200
    %v1202 = vpop.f32.mrb[0].mxu0
    %v1203 = vpop.f32.mrb[0].mxu0
    %1204 = vdwg.mxu0
    %1205 = vmatprep.subr.bf16.mxu0 %v881
    %1206 = vmatpush1.bf16.msra.mxu0 %v880
    %1207 = vmatprep.subr.bf16.mxu0 %v887
    %1208 = vmatpush1.bf16.msra.mxu0 %v886
    %1209 = vmatprep.subr.bf16.mxu0 %v893
    %1210 = vmatpush1.bf16.msra.mxu0 %v892
    %1211 = vmatprep.subr.bf16.mxu0 %v899
    %1212 = vmatpush1.bf16.msra.mxu0 %v898
    %1213 = vmatprep.subr.bf16.mxu0 %v905
    %1214 = vmatpush1.bf16.msra.mxu0 %v904
    %1215 = vmatprep.subr.bf16.mxu0 %v911
    %1216 = vmatpush1.bf16.msra.mxu0 %v910
    %1217 = vmatprep.subr.bf16.mxu0 %v917
    %1218 = vmatpush1.bf16.msra.mxu0 %v916
    %1219 = vmatprep.subr.bf16.mxu0 %v923
    %1220 = vmatpush1.bf16.msra.mxu0 %v922
    %1221 = vmatprep.subr.bf16.mxu0 0
    %1222 = vmatpush1.bf16.msra.mxu0 0
    %1223 = vmatprep.subr.bf16.mxu0 0
    %1224 = vmatpush1.bf16.msra.mxu0 0
    %1225 = vmatprep.subr.bf16.mxu0 0
    %1226 = vmatpush1.bf16.msra.mxu0 0
    %1227 = vmatprep.subr.bf16.mxu0 0
    %1228 = vmatpush1.bf16.msra.mxu0 0
    %1229 = vmatprep.subr.bf16.mxu0 0
    %1230 = vmatpush1.bf16.msra.mxu0 0
    %1231 = vmatprep.subr.bf16.mxu0 0
    %1232 = vmatpush1.bf16.msra.mxu0 0
    %1233 = vmatprep.subr.bf16.mxu0 0
    %1234 = vmatpush1.bf16.msra.mxu0 0
    %1235 = vmatprep.subr.bf16.mxu0 0
    %1236 = vmatpush1.bf16.msra.mxu0 0
    %1237 = vmatprep.mubr.bf16.mxu0 0
    %1238 = vmatmul.mubr.bf16.gmra.mrb[0].mxu0 %v1122
    %v1239 = vpop.f32.mrb[0].mxu0
    %v1240 = vadd.f32 0.0, %v1239
    %v1241 = vpop.f32.mrb[0].mxu0
    %v1242 = vadd.f32 0.0, %v1241
    %v1243 = vpop.f32.mrb[0].mxu0
    %v1244 = vpop.f32.mrb[0].mxu0
    %1245 = vdwg.mxu0
    %v1246 = vsel %vm385, %v1158, %v1201
    %v1247 = vsel %vm385, %v1160, %v1240
    %v1248 = vsel %vm385, %v1199, %v1242
    %v1249 = vadd.f32 %v1246, %v418
    %v1250 = vadd.f32 %v1247, %v419
    %v1251 = vadd.f32 %v1248, %v420
    %v1252 = vadd.f32 %v297, %v1249
    %v1253 = vadd.f32 %v299, %v1250
    %v1254 = vxor.u32 %v1252, 2147483648
    %v1255 = vxor.u32 %v1253, 2147483648
    %v1256 = vmul.f32 %v1254, 1.442695
    %v1257 = vpow.pop %v1256
    %v1258 = vmul.f32 %v1255, 1.442695
    %v1259 = vpow.pop %v1258
    %v1260 = vadd.f32 %v1257, 1.0
    %v1261 = vadd.f32 %v1259, 1.0
    %v1262 = vrcp.pop %v1260
    %v1263 = vmul.f32 1.0, %v1262
    %v1264 = vrcp.pop %v1261
    %v1265 = vmul.f32 1.0, %v1264
    %v1266 = vmul.f32 %v1263, %v1251
    %v1267 = vadd.f32 %v359, %v1266
    %v1268 = vtanh.pop %v1267
    %v1269 = vsub.f32 1.0, %v1265
    %v1270 = vmul.f32 %v1269, %v1268
    %v1271 = vmul.f32 %v1265, %v1121
    %v1272 = vadd.f32 %v1270, %v1271
    %v1273 = vpack.c.bf16 %v1272, %v1272
    %1274 = vmatprep.subr.bf16.mxu0 %v877
    %1275 = vmatpush1.bf16.msra.mxu0 %v876
    %1276 = vmatprep.subr.bf16.mxu0 %v883
    %1277 = vmatpush1.bf16.msra.mxu0 %v882
    %1278 = vmatprep.subr.bf16.mxu0 %v889
    %1279 = vmatpush1.bf16.msra.mxu0 %v888
    %1280 = vmatprep.subr.bf16.mxu0 %v895
    %1281 = vmatpush1.bf16.msra.mxu0 %v894
    %1282 = vmatprep.subr.bf16.mxu0 %v901
    %1283 = vmatpush1.bf16.msra.mxu0 %v900
    %1284 = vmatprep.subr.bf16.mxu0 %v907
    %1285 = vmatpush1.bf16.msra.mxu0 %v906
    %1286 = vmatprep.subr.bf16.mxu0 %v913
    %1287 = vmatpush1.bf16.msra.mxu0 %v912
    %1288 = vmatprep.subr.bf16.mxu0 %v919
    %1289 = vmatpush1.bf16.msra.mxu0 %v918
    %1290 = vmatprep.subr.bf16.mxu0 0
    %1291 = vmatpush1.bf16.msra.mxu0 0
    %1292 = vmatprep.subr.bf16.mxu0 0
    %1293 = vmatpush1.bf16.msra.mxu0 0
    %1294 = vmatprep.subr.bf16.mxu0 0
    %1295 = vmatpush1.bf16.msra.mxu0 0
    %1296 = vmatprep.subr.bf16.mxu0 0
    %1297 = vmatpush1.bf16.msra.mxu0 0
    %1298 = vmatprep.subr.bf16.mxu0 0
    %1299 = vmatpush1.bf16.msra.mxu0 0
    %1300 = vmatprep.subr.bf16.mxu0 0
    %1301 = vmatpush1.bf16.msra.mxu0 0
    %1302 = vmatprep.subr.bf16.mxu0 0
    %1303 = vmatpush1.bf16.msra.mxu0 0
    %1304 = vmatprep.subr.bf16.mxu0 0
    %1305 = vmatpush1.bf16.msra.mxu0 0
    %1306 = vmatprep.mubr.bf16.mxu0 0
    %1307 = vmatmul.mubr.bf16.gmra.mrb[0].mxu0 %v1273
    %v1308 = vpop.f32.mrb[0].mxu0
    %v1309 = vadd.f32 0.0, %v1308
    %v1310 = vpop.f32.mrb[0].mxu0
    %v1311 = vadd.f32 0.0, %v1310
    %v1312 = vpop.f32.mrb[0].mxu0
    %v1313 = vpop.f32.mrb[0].mxu0
    %1314 = vdwg.mxu0
    %1315 = vmatprep.subr.bf16.mxu0 %v879
    %1316 = vmatpush1.bf16.msra.mxu0 %v878
    %1317 = vmatprep.subr.bf16.mxu0 %v885
    %1318 = vmatpush1.bf16.msra.mxu0 %v884
    %1319 = vmatprep.subr.bf16.mxu0 %v891
    %1320 = vmatpush1.bf16.msra.mxu0 %v890
    %1321 = vmatprep.subr.bf16.mxu0 %v897
    %1322 = vmatpush1.bf16.msra.mxu0 %v896
    %1323 = vmatprep.subr.bf16.mxu0 %v903
    %1324 = vmatpush1.bf16.msra.mxu0 %v902
    %1325 = vmatprep.subr.bf16.mxu0 %v909
    %1326 = vmatpush1.bf16.msra.mxu0 %v908
    %1327 = vmatprep.subr.bf16.mxu0 %v915
    %1328 = vmatpush1.bf16.msra.mxu0 %v914
    %1329 = vmatprep.subr.bf16.mxu0 %v921
    %1330 = vmatpush1.bf16.msra.mxu0 %v920
    %1331 = vmatprep.subr.bf16.mxu0 0
    %1332 = vmatpush1.bf16.msra.mxu0 0
    %1333 = vmatprep.subr.bf16.mxu0 0
    %1334 = vmatpush1.bf16.msra.mxu0 0
    %1335 = vmatprep.subr.bf16.mxu0 0
    %1336 = vmatpush1.bf16.msra.mxu0 0
    %1337 = vmatprep.subr.bf16.mxu0 0
    %1338 = vmatpush1.bf16.msra.mxu0 0
    %1339 = vmatprep.subr.bf16.mxu0 0
    %1340 = vmatpush1.bf16.msra.mxu0 0
    %1341 = vmatprep.subr.bf16.mxu0 0
    %1342 = vmatpush1.bf16.msra.mxu0 0
    %1343 = vmatprep.subr.bf16.mxu0 0
    %1344 = vmatpush1.bf16.msra.mxu0 0
    %1345 = vmatprep.subr.bf16.mxu0 0
    %1346 = vmatpush1.bf16.msra.mxu0 0
    %1347 = vmatprep.mubr.bf16.mxu0 0
    %1348 = vmatmul.mubr.bf16.gmra.mrb[0].mxu0 %v1273
    %v1349 = vpop.f32.mrb[0].mxu0
    %v1350 = vadd.f32 0.0, %v1349
    %v1351 = vpop.f32.mrb[0].mxu0
    %v1352 = vadd.f32 0.0, %v1351
    %v1353 = vpop.f32.mrb[0].mxu0
    %v1354 = vpop.f32.mrb[0].mxu0
    %1355 = vdwg.mxu0
    %1356 = vmatprep.subr.bf16.mxu0 %v881
    %1357 = vmatpush1.bf16.msra.mxu0 %v880
    %1358 = vmatprep.subr.bf16.mxu0 %v887
    %1359 = vmatpush1.bf16.msra.mxu0 %v886
    %1360 = vmatprep.subr.bf16.mxu0 %v893
    %1361 = vmatpush1.bf16.msra.mxu0 %v892
    %1362 = vmatprep.subr.bf16.mxu0 %v899
    %1363 = vmatpush1.bf16.msra.mxu0 %v898
    %1364 = vmatprep.subr.bf16.mxu0 %v905
    %1365 = vmatpush1.bf16.msra.mxu0 %v904
    %1366 = vmatprep.subr.bf16.mxu0 %v911
    %1367 = vmatpush1.bf16.msra.mxu0 %v910
    %1368 = vmatprep.subr.bf16.mxu0 %v917
    %1369 = vmatpush1.bf16.msra.mxu0 %v916
    %1370 = vmatprep.subr.bf16.mxu0 %v923
    %1371 = vmatpush1.bf16.msra.mxu0 %v922
    %1372 = vmatprep.subr.bf16.mxu0 0
    %1373 = vmatpush1.bf16.msra.mxu0 0
    %1374 = vmatprep.subr.bf16.mxu0 0
    %1375 = vmatpush1.bf16.msra.mxu0 0
    %1376 = vmatprep.subr.bf16.mxu0 0
    %1377 = vmatpush1.bf16.msra.mxu0 0
    %1378 = vmatprep.subr.bf16.mxu0 0
    %1379 = vmatpush1.bf16.msra.mxu0 0
    %1380 = vmatprep.subr.bf16.mxu0 0
    %1381 = vmatpush1.bf16.msra.mxu0 0
    %1382 = vmatprep.subr.bf16.mxu0 0
    %1383 = vmatpush1.bf16.msra.mxu0 0
    %1384 = vmatprep.subr.bf16.mxu0 0
    %1385 = vmatpush1.bf16.msra.mxu0 0
    %1386 = vmatprep.subr.bf16.mxu0 0
    %1387 = vmatpush1.bf16.msra.mxu0 0
    %1388 = vmatprep.mubr.bf16.mxu0 0
    %1389 = vmatmul.mubr.bf16.gmra.mrb[0].mxu0 %v1273
    %v1390 = vpop.f32.mrb[0].mxu0
    %v1391 = vadd.f32 0.0, %v1390
    %v1392 = vpop.f32.mrb[0].mxu0
    %v1393 = vadd.f32 0.0, %v1392
    %v1394 = vpop.f32.mrb[0].mxu0
    %v1395 = vpop.f32.mrb[0].mxu0
    %1396 = vdwg.mxu0
    %v1397 = vsel %vm385, %v1309, %v1352
    %v1398 = vsel %vm385, %v1311, %v1391
    %v1399 = vsel %vm385, %v1350, %v1393
    %v1400 = vadd.f32 %v1397, %v418
    %v1401 = vadd.f32 %v1398, %v419
    %v1402 = vadd.f32 %v1399, %v420
    %v1403 = vadd.f32 %v303, %v1400
    %v1404 = vadd.f32 %v305, %v1401
    %v1405 = vxor.u32 %v1403, 2147483648
    %v1406 = vxor.u32 %v1404, 2147483648
    %v1407 = vmul.f32 %v1405, 1.442695
    %v1408 = vpow.pop %v1407
    %v1409 = vmul.f32 %v1406, 1.442695
    %v1410 = vpow.pop %v1409
    %v1411 = vadd.f32 %v1408, 1.0
    %v1412 = vadd.f32 %v1410, 1.0
    %v1413 = vrcp.pop %v1411
    %v1414 = vmul.f32 1.0, %v1413
    %v1415 = vrcp.pop %v1412
    %v1416 = vmul.f32 1.0, %v1415
    %v1417 = vmul.f32 %v1414, %v1402
    %v1418 = vadd.f32 %v364, %v1417
    %v1419 = vtanh.pop %v1418
    %v1420 = vsub.f32 1.0, %v1416
    %v1421 = vmul.f32 %v1420, %v1419
    %v1422 = vmul.f32 %v1416, %v1272
    %v1423 = vadd.f32 %v1421, %v1422
    %v1424 = vpack.c.bf16 %v1423, %v1423
    %1425 = vmatprep.subr.bf16.mxu0 %v877
    %1426 = vmatpush1.bf16.msra.mxu0 %v876
    %1427 = vmatprep.subr.bf16.mxu0 %v883
    %1428 = vmatpush1.bf16.msra.mxu0 %v882
    %1429 = vmatprep.subr.bf16.mxu0 %v889
    %1430 = vmatpush1.bf16.msra.mxu0 %v888
    %1431 = vmatprep.subr.bf16.mxu0 %v895
    %1432 = vmatpush1.bf16.msra.mxu0 %v894
    %1433 = vmatprep.subr.bf16.mxu0 %v901
    %1434 = vmatpush1.bf16.msra.mxu0 %v900
    %1435 = vmatprep.subr.bf16.mxu0 %v907
    %1436 = vmatpush1.bf16.msra.mxu0 %v906
    %1437 = vmatprep.subr.bf16.mxu0 %v913
    %1438 = vmatpush1.bf16.msra.mxu0 %v912
    %1439 = vmatprep.subr.bf16.mxu0 %v919
    %1440 = vmatpush1.bf16.msra.mxu0 %v918
    %1441 = vmatprep.subr.bf16.mxu0 0
    %1442 = vmatpush1.bf16.msra.mxu0 0
    %1443 = vmatprep.subr.bf16.mxu0 0
    %1444 = vmatpush1.bf16.msra.mxu0 0
    %1445 = vmatprep.subr.bf16.mxu0 0
    %1446 = vmatpush1.bf16.msra.mxu0 0
    %1447 = vmatprep.subr.bf16.mxu0 0
    %1448 = vmatpush1.bf16.msra.mxu0 0
    %1449 = vmatprep.subr.bf16.mxu0 0
    %1450 = vmatpush1.bf16.msra.mxu0 0
    %1451 = vmatprep.subr.bf16.mxu0 0
    %1452 = vmatpush1.bf16.msra.mxu0 0
    %1453 = vmatprep.subr.bf16.mxu0 0
    %1454 = vmatpush1.bf16.msra.mxu0 0
    %1455 = vmatprep.subr.bf16.mxu0 0
    %1456 = vmatpush1.bf16.msra.mxu0 0
    %1457 = vmatprep.mubr.bf16.mxu0 0
    %1458 = vmatmul.mubr.bf16.gmra.mrb[0].mxu0 %v1424
    %v1459 = vpop.f32.mrb[0].mxu0
    %v1460 = vadd.f32 0.0, %v1459
    %v1461 = vpop.f32.mrb[0].mxu0
    %v1462 = vadd.f32 0.0, %v1461
    %v1463 = vpop.f32.mrb[0].mxu0
    %v1464 = vpop.f32.mrb[0].mxu0
    %1465 = vdwg.mxu0
    %1466 = vmatprep.subr.bf16.mxu0 %v879
    %1467 = vmatpush1.bf16.msra.mxu0 %v878
    %1468 = vmatprep.subr.bf16.mxu0 %v885
    %1469 = vmatpush1.bf16.msra.mxu0 %v884
    %1470 = vmatprep.subr.bf16.mxu0 %v891
    %1471 = vmatpush1.bf16.msra.mxu0 %v890
    %1472 = vmatprep.subr.bf16.mxu0 %v897
    %1473 = vmatpush1.bf16.msra.mxu0 %v896
    %1474 = vmatprep.subr.bf16.mxu0 %v903
    %1475 = vmatpush1.bf16.msra.mxu0 %v902
    %1476 = vmatprep.subr.bf16.mxu0 %v909
    %1477 = vmatpush1.bf16.msra.mxu0 %v908
    %1478 = vmatprep.subr.bf16.mxu0 %v915
    %1479 = vmatpush1.bf16.msra.mxu0 %v914
    %1480 = vmatprep.subr.bf16.mxu0 %v921
    %1481 = vmatpush1.bf16.msra.mxu0 %v920
    %1482 = vmatprep.subr.bf16.mxu0 0
    %1483 = vmatpush1.bf16.msra.mxu0 0
    %1484 = vmatprep.subr.bf16.mxu0 0
    %1485 = vmatpush1.bf16.msra.mxu0 0
    %1486 = vmatprep.subr.bf16.mxu0 0
    %1487 = vmatpush1.bf16.msra.mxu0 0
    %1488 = vmatprep.subr.bf16.mxu0 0
    %1489 = vmatpush1.bf16.msra.mxu0 0
    %1490 = vmatprep.subr.bf16.mxu0 0
    %1491 = vmatpush1.bf16.msra.mxu0 0
    %1492 = vmatprep.subr.bf16.mxu0 0
    %1493 = vmatpush1.bf16.msra.mxu0 0
    %1494 = vmatprep.subr.bf16.mxu0 0
    %1495 = vmatpush1.bf16.msra.mxu0 0
    %1496 = vmatprep.subr.bf16.mxu0 0
    %1497 = vmatpush1.bf16.msra.mxu0 0
    %1498 = vmatprep.mubr.bf16.mxu0 0
    %1499 = vmatmul.mubr.bf16.gmra.mrb[0].mxu0 %v1424
    %v1500 = vpop.f32.mrb[0].mxu0
    %v1501 = vadd.f32 0.0, %v1500
    %v1502 = vpop.f32.mrb[0].mxu0
    %v1503 = vadd.f32 0.0, %v1502
    %v1504 = vpop.f32.mrb[0].mxu0
    %v1505 = vpop.f32.mrb[0].mxu0
    %1506 = vdwg.mxu0
    %1507 = vmatprep.subr.bf16.mxu0 %v881
    %1508 = vmatpush1.bf16.msra.mxu0 %v880
    %1509 = vmatprep.subr.bf16.mxu0 %v887
    %1510 = vmatpush1.bf16.msra.mxu0 %v886
    %1511 = vmatprep.subr.bf16.mxu0 %v893
    %1512 = vmatpush1.bf16.msra.mxu0 %v892
    %1513 = vmatprep.subr.bf16.mxu0 %v899
    %1514 = vmatpush1.bf16.msra.mxu0 %v898
    %1515 = vmatprep.subr.bf16.mxu0 %v905
    %1516 = vmatpush1.bf16.msra.mxu0 %v904
    %1517 = vmatprep.subr.bf16.mxu0 %v911
    %1518 = vmatpush1.bf16.msra.mxu0 %v910
    %1519 = vmatprep.subr.bf16.mxu0 %v917
    %1520 = vmatpush1.bf16.msra.mxu0 %v916
    %1521 = vmatprep.subr.bf16.mxu0 %v923
    %1522 = vmatpush1.bf16.msra.mxu0 %v922
    %1523 = vmatprep.subr.bf16.mxu0 0
    %1524 = vmatpush1.bf16.msra.mxu0 0
    %1525 = vmatprep.subr.bf16.mxu0 0
    %1526 = vmatpush1.bf16.msra.mxu0 0
    %1527 = vmatprep.subr.bf16.mxu0 0
    %1528 = vmatpush1.bf16.msra.mxu0 0
    %1529 = vmatprep.subr.bf16.mxu0 0
    %1530 = vmatpush1.bf16.msra.mxu0 0
    %1531 = vmatprep.subr.bf16.mxu0 0
    %1532 = vmatpush1.bf16.msra.mxu0 0
    %1533 = vmatprep.subr.bf16.mxu0 0
    %1534 = vmatpush1.bf16.msra.mxu0 0
    %1535 = vmatprep.subr.bf16.mxu0 0
    %1536 = vmatpush1.bf16.msra.mxu0 0
    %1537 = vmatprep.subr.bf16.mxu0 0
    %1538 = vmatpush1.bf16.msra.mxu0 0
    %1539 = vmatprep.mubr.bf16.mxu0 0
    %1540 = vmatmul.mubr.bf16.gmra.mrb[0].mxu0 %v1424
    %v1541 = vpop.f32.mrb[0].mxu0
    %v1542 = vadd.f32 0.0, %v1541
    %v1543 = vpop.f32.mrb[0].mxu0
    %v1544 = vadd.f32 0.0, %v1543
    %v1545 = vpop.f32.mrb[0].mxu0
    %v1546 = vpop.f32.mrb[0].mxu0
    %1547 = vdwg.mxu0
    %v1548 = vsel %vm385, %v1460, %v1503
    %v1549 = vsel %vm385, %v1462, %v1542
    %v1550 = vsel %vm385, %v1501, %v1544
    %v1551 = vadd.f32 %v1548, %v418
    %v1552 = vadd.f32 %v1549, %v419
    %v1553 = vadd.f32 %v1550, %v420
    %v1554 = vadd.f32 %v307, %v1551
    %v1555 = vadd.f32 %v309, %v1552
    %v1556 = vxor.u32 %v1554, 2147483648
    %v1557 = vxor.u32 %v1555, 2147483648
    %v1558 = vmul.f32 %v1556, 1.442695
    %v1559 = vpow.pop %v1558
    %v1560 = vmul.f32 %v1557, 1.442695
    %v1561 = vpow.pop %v1560
    %v1562 = vadd.f32 %v1559, 1.0
    %v1563 = vadd.f32 %v1561, 1.0
    %v1564 = vrcp.pop %v1562
    %v1565 = vmul.f32 1.0, %v1564
    %v1566 = vrcp.pop %v1563
    %v1567 = vmul.f32 1.0, %v1566
    %v1568 = vmul.f32 %v1565, %v1553
    %v1569 = vadd.f32 %v367, %v1568
    %v1570 = vtanh.pop %v1569
    %v1571 = vsub.f32 1.0, %v1567
    %v1572 = vmul.f32 %v1571, %v1570
    %v1573 = vmul.f32 %v1567, %v1423
    %v1574 = vadd.f32 %v1572, %v1573
    %v1575 = vpack.c.bf16 %v1574, %v1574
    %1576 = vmatprep.subr.bf16.mxu0 %v877
    %1577 = vmatpush1.bf16.msra.mxu0 %v876
    %1578 = vmatprep.subr.bf16.mxu0 %v883
    %1579 = vmatpush1.bf16.msra.mxu0 %v882
    %1580 = vmatprep.subr.bf16.mxu0 %v889
    %1581 = vmatpush1.bf16.msra.mxu0 %v888
    %1582 = vmatprep.subr.bf16.mxu0 %v895
    %1583 = vmatpush1.bf16.msra.mxu0 %v894
    %1584 = vmatprep.subr.bf16.mxu0 %v901
    %1585 = vmatpush1.bf16.msra.mxu0 %v900
    %1586 = vmatprep.subr.bf16.mxu0 %v907
    %1587 = vmatpush1.bf16.msra.mxu0 %v906
    %1588 = vmatprep.subr.bf16.mxu0 %v913
    %1589 = vmatpush1.bf16.msra.mxu0 %v912
    %1590 = vmatprep.subr.bf16.mxu0 %v919
    %1591 = vmatpush1.bf16.msra.mxu0 %v918
    %1592 = vmatprep.subr.bf16.mxu0 0
    %1593 = vmatpush1.bf16.msra.mxu0 0
    %1594 = vmatprep.subr.bf16.mxu0 0
    %1595 = vmatpush1.bf16.msra.mxu0 0
    %1596 = vmatprep.subr.bf16.mxu0 0
    %1597 = vmatpush1.bf16.msra.mxu0 0
    %1598 = vmatprep.subr.bf16.mxu0 0
    %1599 = vmatpush1.bf16.msra.mxu0 0
    %1600 = vmatprep.subr.bf16.mxu0 0
    %1601 = vmatpush1.bf16.msra.mxu0 0
    %1602 = vmatprep.subr.bf16.mxu0 0
    %1603 = vmatpush1.bf16.msra.mxu0 0
    %1604 = vmatprep.subr.bf16.mxu0 0
    %1605 = vmatpush1.bf16.msra.mxu0 0
    %1606 = vmatprep.subr.bf16.mxu0 0
    %1607 = vmatpush1.bf16.msra.mxu0 0
    %1608 = vmatprep.mubr.bf16.mxu0 0
    %1609 = vmatmul.mubr.bf16.gmra.mrb[0].mxu0 %v1575
    %v1610 = vpop.f32.mrb[0].mxu0
    %v1611 = vadd.f32 0.0, %v1610
    %v1612 = vpop.f32.mrb[0].mxu0
    %v1613 = vadd.f32 0.0, %v1612
    %v1614 = vpop.f32.mrb[0].mxu0
    %v1615 = vpop.f32.mrb[0].mxu0
    %1616 = vdwg.mxu0
    %1617 = vmatprep.subr.bf16.mxu0 %v879
    %1618 = vmatpush1.bf16.msra.mxu0 %v878
    %1619 = vmatprep.subr.bf16.mxu0 %v885
    %1620 = vmatpush1.bf16.msra.mxu0 %v884
    %1621 = vmatprep.subr.bf16.mxu0 %v891
    %1622 = vmatpush1.bf16.msra.mxu0 %v890
    %1623 = vmatprep.subr.bf16.mxu0 %v897
    %1624 = vmatpush1.bf16.msra.mxu0 %v896
    %1625 = vmatprep.subr.bf16.mxu0 %v903
    %1626 = vmatpush1.bf16.msra.mxu0 %v902
    %1627 = vmatprep.subr.bf16.mxu0 %v909
    %1628 = vmatpush1.bf16.msra.mxu0 %v908
    %1629 = vmatprep.subr.bf16.mxu0 %v915
    %1630 = vmatpush1.bf16.msra.mxu0 %v914
    %1631 = vmatprep.subr.bf16.mxu0 %v921
    %1632 = vmatpush1.bf16.msra.mxu0 %v920
    %1633 = vmatprep.subr.bf16.mxu0 0
    %1634 = vmatpush1.bf16.msra.mxu0 0
    %1635 = vmatprep.subr.bf16.mxu0 0
    %1636 = vmatpush1.bf16.msra.mxu0 0
    %1637 = vmatprep.subr.bf16.mxu0 0
    %1638 = vmatpush1.bf16.msra.mxu0 0
    %1639 = vmatprep.subr.bf16.mxu0 0
    %1640 = vmatpush1.bf16.msra.mxu0 0
    %1641 = vmatprep.subr.bf16.mxu0 0
    %1642 = vmatpush1.bf16.msra.mxu0 0
    %1643 = vmatprep.subr.bf16.mxu0 0
    %1644 = vmatpush1.bf16.msra.mxu0 0
    %1645 = vmatprep.subr.bf16.mxu0 0
    %1646 = vmatpush1.bf16.msra.mxu0 0
    %1647 = vmatprep.subr.bf16.mxu0 0
    %1648 = vmatpush1.bf16.msra.mxu0 0
    %1649 = vmatprep.mubr.bf16.mxu0 0
    %1650 = vmatmul.mubr.bf16.gmra.mrb[0].mxu0 %v1575
    %v1651 = vpop.f32.mrb[0].mxu0
    %v1652 = vadd.f32 0.0, %v1651
    %v1653 = vpop.f32.mrb[0].mxu0
    %v1654 = vadd.f32 0.0, %v1653
    %v1655 = vpop.f32.mrb[0].mxu0
    %v1656 = vpop.f32.mrb[0].mxu0
    %1657 = vdwg.mxu0
    %1658 = vmatprep.subr.bf16.mxu0 %v881
    %1659 = vmatpush1.bf16.msra.mxu0 %v880
    %1660 = vmatprep.subr.bf16.mxu0 %v887
    %1661 = vmatpush1.bf16.msra.mxu0 %v886
    %1662 = vmatprep.subr.bf16.mxu0 %v893
    %1663 = vmatpush1.bf16.msra.mxu0 %v892
    %1664 = vmatprep.subr.bf16.mxu0 %v899
    %1665 = vmatpush1.bf16.msra.mxu0 %v898
    %1666 = vmatprep.subr.bf16.mxu0 %v905
    %1667 = vmatpush1.bf16.msra.mxu0 %v904
    %1668 = vmatprep.subr.bf16.mxu0 %v911
    %1669 = vmatpush1.bf16.msra.mxu0 %v910
    %1670 = vmatprep.subr.bf16.mxu0 %v917
    %1671 = vmatpush1.bf16.msra.mxu0 %v916
    %1672 = vmatprep.subr.bf16.mxu0 %v923
    %1673 = vmatpush1.bf16.msra.mxu0 %v922
    %1674 = vmatprep.subr.bf16.mxu0 0
    %1675 = vmatpush1.bf16.msra.mxu0 0
    %1676 = vmatprep.subr.bf16.mxu0 0
    %1677 = vmatpush1.bf16.msra.mxu0 0
    %1678 = vmatprep.subr.bf16.mxu0 0
    %1679 = vmatpush1.bf16.msra.mxu0 0
    %1680 = vmatprep.subr.bf16.mxu0 0
    %1681 = vmatpush1.bf16.msra.mxu0 0
    %1682 = vmatprep.subr.bf16.mxu0 0
    %1683 = vmatpush1.bf16.msra.mxu0 0
    %1684 = vmatprep.subr.bf16.mxu0 0
    %1685 = vmatpush1.bf16.msra.mxu0 0
    %1686 = vmatprep.subr.bf16.mxu0 0
    %1687 = vmatpush1.bf16.msra.mxu0 0
    %1688 = vmatprep.subr.bf16.mxu0 0
    %1689 = vmatpush1.bf16.msra.mxu0 0
    %1690 = vmatprep.mubr.bf16.mxu0 0
    %1691 = vmatmul.mubr.bf16.gmra.mrb[0].mxu0 %v1575
    %v1692 = vpop.f32.mrb[0].mxu0
    %v1693 = vadd.f32 0.0, %v1692
    %v1694 = vpop.f32.mrb[0].mxu0
    %v1695 = vadd.f32 0.0, %v1694
    %v1696 = vpop.f32.mrb[0].mxu0
    %v1697 = vpop.f32.mrb[0].mxu0
    %1698 = vdwg.mxu0
    %v1699 = vsel %vm385, %v1611, %v1654
    %v1700 = vsel %vm385, %v1613, %v1693
    %v1701 = vsel %vm385, %v1652, %v1695
    %v1702 = vadd.f32 %v1699, %v418
    %v1703 = vadd.f32 %v1700, %v419
    %v1704 = vadd.f32 %v1701, %v420
    %v1705 = vadd.f32 %v313, %v1702
    %v1706 = vadd.f32 %v315, %v1703
    %v1707 = vxor.u32 %v1705, 2147483648
    %v1708 = vxor.u32 %v1706, 2147483648
    %v1709 = vmul.f32 %v1707, 1.442695
    %v1710 = vpow.pop %v1709
    %v1711 = vmul.f32 %v1708, 1.442695
    %v1712 = vpow.pop %v1711
    %v1713 = vadd.f32 %v1710, 1.0
    %v1714 = vadd.f32 %v1712, 1.0
    %v1715 = vrcp.pop %v1713
    %v1716 = vmul.f32 1.0, %v1715
    %v1717 = vrcp.pop %v1714
    %v1718 = vmul.f32 1.0, %v1717
    %v1719 = vmul.f32 %v1716, %v1704
    %v1720 = vadd.f32 %v372, %v1719
    %v1721 = vtanh.pop %v1720
    %v1722 = vsub.f32 1.0, %v1718
    %v1723 = vmul.f32 %v1722, %v1721
    %v1724 = vmul.f32 %v1718, %v1574
    %v1725 = vadd.f32 %v1723, %v1724
    %v1726 = vpack.c.bf16 %v1725, %v1725
    %1727 = vmatprep.subr.bf16.mxu0 %v877
    %1728 = vmatpush1.bf16.msra.mxu0 %v876
    %1729 = vmatprep.subr.bf16.mxu0 %v883
    %1730 = vmatpush1.bf16.msra.mxu0 %v882
    %1731 = vmatprep.subr.bf16.mxu0 %v889
    %1732 = vmatpush1.bf16.msra.mxu0 %v888
    %1733 = vmatprep.subr.bf16.mxu0 %v895
    %1734 = vmatpush1.bf16.msra.mxu0 %v894
    %1735 = vmatprep.subr.bf16.mxu0 %v901
    %1736 = vmatpush1.bf16.msra.mxu0 %v900
    %1737 = vmatprep.subr.bf16.mxu0 %v907
    %1738 = vmatpush1.bf16.msra.mxu0 %v906
    %1739 = vmatprep.subr.bf16.mxu0 %v913
    %1740 = vmatpush1.bf16.msra.mxu0 %v912
    %1741 = vmatprep.subr.bf16.mxu0 %v919
    %1742 = vmatpush1.bf16.msra.mxu0 %v918
    %1743 = vmatprep.subr.bf16.mxu0 0
    %1744 = vmatpush1.bf16.msra.mxu0 0
    %1745 = vmatprep.subr.bf16.mxu0 0
    %1746 = vmatpush1.bf16.msra.mxu0 0
    %1747 = vmatprep.subr.bf16.mxu0 0
    %1748 = vmatpush1.bf16.msra.mxu0 0
    %1749 = vmatprep.subr.bf16.mxu0 0
    %1750 = vmatpush1.bf16.msra.mxu0 0
    %1751 = vmatprep.subr.bf16.mxu0 0
    %1752 = vmatpush1.bf16.msra.mxu0 0
    %1753 = vmatprep.subr.bf16.mxu0 0
    %1754 = vmatpush1.bf16.msra.mxu0 0
    %1755 = vmatprep.subr.bf16.mxu0 0
    %1756 = vmatpush1.bf16.msra.mxu0 0
    %1757 = vmatprep.subr.bf16.mxu0 0
    %1758 = vmatpush1.bf16.msra.mxu0 0
    %1759 = vmatprep.mubr.bf16.mxu0 0
    %1760 = vmatmul.mubr.bf16.gmra.mrb[0].mxu0 %v1726
    %v1761 = vpop.f32.mrb[0].mxu0
    %v1762 = vadd.f32 0.0, %v1761
    %v1763 = vpop.f32.mrb[0].mxu0
    %v1764 = vadd.f32 0.0, %v1763
    %v1765 = vpop.f32.mrb[0].mxu0
    %v1766 = vpop.f32.mrb[0].mxu0
    %1767 = vdwg.mxu0
    %1768 = vmatprep.subr.bf16.mxu0 %v879
    %1769 = vmatpush1.bf16.msra.mxu0 %v878
    %1770 = vmatprep.subr.bf16.mxu0 %v885
    %1771 = vmatpush1.bf16.msra.mxu0 %v884
    %1772 = vmatprep.subr.bf16.mxu0 %v891
    %1773 = vmatpush1.bf16.msra.mxu0 %v890
    %1774 = vmatprep.subr.bf16.mxu0 %v897
    %1775 = vmatpush1.bf16.msra.mxu0 %v896
    %1776 = vmatprep.subr.bf16.mxu0 %v903
    %1777 = vmatpush1.bf16.msra.mxu0 %v902
    %1778 = vmatprep.subr.bf16.mxu0 %v909
    %1779 = vmatpush1.bf16.msra.mxu0 %v908
    %1780 = vmatprep.subr.bf16.mxu0 %v915
    %1781 = vmatpush1.bf16.msra.mxu0 %v914
    %1782 = vmatprep.subr.bf16.mxu0 %v921
    %1783 = vmatpush1.bf16.msra.mxu0 %v920
    %1784 = vmatprep.subr.bf16.mxu0 0
    %1785 = vmatpush1.bf16.msra.mxu0 0
    %1786 = vmatprep.subr.bf16.mxu0 0
    %1787 = vmatpush1.bf16.msra.mxu0 0
    %1788 = vmatprep.subr.bf16.mxu0 0
    %1789 = vmatpush1.bf16.msra.mxu0 0
    %1790 = vmatprep.subr.bf16.mxu0 0
    %1791 = vmatpush1.bf16.msra.mxu0 0
    %1792 = vmatprep.subr.bf16.mxu0 0
    %1793 = vmatpush1.bf16.msra.mxu0 0
    %1794 = vmatprep.subr.bf16.mxu0 0
    %1795 = vmatpush1.bf16.msra.mxu0 0
    %1796 = vmatprep.subr.bf16.mxu0 0
    %1797 = vmatpush1.bf16.msra.mxu0 0
    %1798 = vmatprep.subr.bf16.mxu0 0
    %1799 = vmatpush1.bf16.msra.mxu0 0
    %1800 = vmatprep.mubr.bf16.mxu0 0
    %1801 = vmatmul.mubr.bf16.gmra.mrb[0].mxu0 %v1726
    %v1802 = vpop.f32.mrb[0].mxu0
    %v1803 = vadd.f32 0.0, %v1802
    %v1804 = vpop.f32.mrb[0].mxu0
    %v1805 = vadd.f32 0.0, %v1804
    %v1806 = vpop.f32.mrb[0].mxu0
    %v1807 = vpop.f32.mrb[0].mxu0
    %1808 = vdwg.mxu0
    %1809 = vmatprep.subr.bf16.mxu0 %v881
    %1810 = vmatpush1.bf16.msra.mxu0 %v880
    %1811 = vmatprep.subr.bf16.mxu0 %v887
    %1812 = vmatpush1.bf16.msra.mxu0 %v886
    %1813 = vmatprep.subr.bf16.mxu0 %v893
    %1814 = vmatpush1.bf16.msra.mxu0 %v892
    %1815 = vmatprep.subr.bf16.mxu0 %v899
    %1816 = vmatpush1.bf16.msra.mxu0 %v898
    %1817 = vmatprep.subr.bf16.mxu0 %v905
    %1818 = vmatpush1.bf16.msra.mxu0 %v904
    %1819 = vmatprep.subr.bf16.mxu0 %v911
    %1820 = vmatpush1.bf16.msra.mxu0 %v910
    %1821 = vmatprep.subr.bf16.mxu0 %v917
    %1822 = vmatpush1.bf16.msra.mxu0 %v916
    %1823 = vmatprep.subr.bf16.mxu0 %v923
    %1824 = vmatpush1.bf16.msra.mxu0 %v922
    %1825 = vmatprep.subr.bf16.mxu0 0
    %1826 = vmatpush1.bf16.msra.mxu0 0
    %1827 = vmatprep.subr.bf16.mxu0 0
    %1828 = vmatpush1.bf16.msra.mxu0 0
    %1829 = vmatprep.subr.bf16.mxu0 0
    %1830 = vmatpush1.bf16.msra.mxu0 0
    %1831 = vmatprep.subr.bf16.mxu0 0
    %1832 = vmatpush1.bf16.msra.mxu0 0
    %1833 = vmatprep.subr.bf16.mxu0 0
    %1834 = vmatpush1.bf16.msra.mxu0 0
    %1835 = vmatprep.subr.bf16.mxu0 0
    %1836 = vmatpush1.bf16.msra.mxu0 0
    %1837 = vmatprep.subr.bf16.mxu0 0
    %1838 = vmatpush1.bf16.msra.mxu0 0
    %1839 = vmatprep.subr.bf16.mxu0 0
    %1840 = vmatpush1.bf16.msra.mxu0 0
    %1841 = vmatprep.mubr.bf16.mxu0 0
    %1842 = vmatmul.mubr.bf16.gmra.mrb[0].mxu0 %v1726
    %v1843 = vpop.f32.mrb[0].mxu0
    %v1844 = vadd.f32 0.0, %v1843
    %v1845 = vpop.f32.mrb[0].mxu0
    %v1846 = vadd.f32 0.0, %v1845
    %v1847 = vpop.f32.mrb[0].mxu0
    %v1848 = vpop.f32.mrb[0].mxu0
    %1849 = vdwg.mxu0
    %v1850 = vsel %vm385, %v1762, %v1805
    %v1851 = vsel %vm385, %v1764, %v1844
    %v1852 = vsel %vm385, %v1803, %v1846
    %v1853 = vadd.f32 %v1850, %v418
    %v1854 = vadd.f32 %v1851, %v419
    %v1855 = vadd.f32 %v1852, %v420
    %v1856 = vadd.f32 %v317, %v1853
    %v1857 = vadd.f32 %v319, %v1854
    %v1858 = vxor.u32 %v1856, 2147483648
    %v1859 = vxor.u32 %v1857, 2147483648
    %v1860 = vmul.f32 %v1858, 1.442695
    %v1861 = vpow.pop %v1860
    %v1862 = vmul.f32 %v1859, 1.442695
    %v1863 = vpow.pop %v1862
    %v1864 = vadd.f32 %v1861, 1.0
    %v1865 = vadd.f32 %v1863, 1.0
    %v1866 = vrcp.pop %v1864
    %v1867 = vmul.f32 1.0, %v1866
    %v1868 = vrcp.pop %v1865
    %v1869 = vmul.f32 1.0, %v1868
    %v1870 = vmul.f32 %v1867, %v1855
    %v1871 = vadd.f32 %v375, %v1870
    %v1872 = vtanh.pop %v1871
    %v1873 = vsub.f32 1.0, %v1869
    %v1874 = vmul.f32 %v1873, %v1872
    %v1875 = vmul.f32 %v1869, %v1725
    %v1876 = vadd.f32 %v1874, %v1875
    %v1877 = vsel %vm385, %v1876, %v1725
    %v1878 = vpack.c.bf16 %v1877, %v1877
    %v1879 = vld [vmem:[#allocation7 + $0x18] sm:$0xff]
    %v1880 = vld [vmem:[#allocation7 + $0x20] sm:$0xf]
    %v1881 = vld [vmem:[#allocation7 + $0x4c] sm:$0xff]
    %v1882 = vld [vmem:[#allocation7 + $0x54] sm:$0xf]
    %v1883 = vld [vmem:[#allocation7 + $0x80] sm:$0xff]
    %v1884 = vld [vmem:[#allocation7 + $0x88] sm:$0xf]
    %v1885 = vld [vmem:[#allocation7 + $0xb4] sm:$0xff]
    %v1886 = vld [vmem:[#allocation7 + $0xbc] sm:$0xf]
    %v1887 = vld [vmem:[#allocation7 + $0xe8] sm:$0xff]
    %v1888 = vld [vmem:[#allocation7 + $0xf0] sm:$0xf]
    %v1889 = vld [vmem:[#allocation7 + $0x11c] sm:$0xff]
    %v1890 = vld [vmem:[#allocation7 + $0x124] sm:$0xf]
    %v1891 = vld [vmem:[#allocation7 + $0x150] sm:$0xff]
    %v1892 = vld [vmem:[#allocation7 + $0x158] sm:$0xf]
    %v1893 = vld [vmem:[#allocation7 + $0x184] sm:$0xff]
    %v1894 = vld [vmem:[#allocation7 + $0x18c] sm:$0xf]
    %v1895 = vld [vmem:[#allocation7 + $0x1b8] sm:$0xff]
    %v1896 = vld [vmem:[#allocation7 + $0x1c0] sm:$0xf]
    %v1897 = vld [vmem:[#allocation7 + $0x1ec] sm:$0xff]
    %v1898 = vld [vmem:[#allocation7 + $0x1f4] sm:$0xf]
    %v1899 = vld [vmem:[#allocation7 + $0x220] sm:$0xff]
    %v1900 = vld [vmem:[#allocation7 + $0x228] sm:$0xf]
    %v1901 = vld [vmem:[#allocation7 + $0x254] sm:$0xff]
    %v1902 = vld [vmem:[#allocation7 + $0x25c] sm:$0xf]
    %v1903 = vld [vmem:[#allocation7 + $0x288] sm:$0xff]
    %v1904 = vld [vmem:[#allocation7 + $0x290] sm:$0xf]
    %v1905 = vld [vmem:[#allocation7 + $0x2bc] sm:$0xff]
    %v1906 = vld [vmem:[#allocation7 + $0x2c4] sm:$0xf]
    %v1907 = vld [vmem:[#allocation7 + $0x2f0] sm:$0xff]
    %v1908 = vld [vmem:[#allocation7 + $0x2f8] sm:$0xf]
    %v1909 = vld [vmem:[#allocation7 + $0x324] sm:$0xff]
    %v1910 = vld [vmem:[#allocation7 + $0x32c] sm:$0xf]
    %s1911 = scalar_lea.vmem %s4, 2
    %v1912 = vld [vmem:[%s1911] ss:$8 sm:$0x7]
    %v1914 = vlaneseq
    %v1915 = vshrl.u32 %v1914, 7
    %v1916 = vsub.s32 0, %v1915
    %v1917 = vrot.slane %v1912, %v1916
    %v1918 = vlaneseq
    %v1919 = vshrl.u32 %v1918, 7
    %v1920 = vsub.s32 1, %v1919
    %v1921 = vrot.slane %v1912, %v1920
    %v1922 = vlaneseq
    %v1923 = vshrl.u32 %v1922, 7
    %v1924 = vsub.s32 2, %v1923
    %v1925 = vrot.slane %v1912, %v1924
    %v1961 = vunpack.c.l.b16 %v1879
    %v1962 = vunpack.c.h.b16 %v1879
    %v1963 = vunpack.c.l.b16 %v1880
    %v1964 = vunpack.c.l.b16 %v1881
    %v1965 = vunpack.c.h.b16 %v1881
    %v1966 = vunpack.c.l.b16 %v1882
    %v1967 = vunpack.c.l.b16 %v1883
    %v1968 = vunpack.c.h.b16 %v1883
    %v1969 = vunpack.c.l.b16 %v1884
    %v1970 = vunpack.c.l.b16 %v1885
    %v1971 = vunpack.c.h.b16 %v1885
    %v1972 = vunpack.c.l.b16 %v1886
    %v1973 = vunpack.c.l.b16 %v1887
    %v1974 = vunpack.c.h.b16 %v1887
    %v1975 = vunpack.c.l.b16 %v1888
    %v1976 = vunpack.c.l.b16 %v1889
    %v1977 = vunpack.c.h.b16 %v1889
    %v1978 = vunpack.c.l.b16 %v1890
    %v1979 = vunpack.c.l.b16 %v1891
    %v1980 = vunpack.c.h.b16 %v1891
    %v1981 = vunpack.c.l.b16 %v1892
    %v1982 = vunpack.c.l.b16 %v1893
    %v1983 = vunpack.c.h.b16 %v1893
    %v1984 = vunpack.c.l.b16 %v1894
    %v1985 = vunpack.c.l.b16 %v1895
    %v1986 = vunpack.c.h.b16 %v1895
    %v1987 = vunpack.c.l.b16 %v1896
    %v1988 = vunpack.c.l.b16 %v1897
    %v1989 = vunpack.c.h.b16 %v1897
    %v1990 = vunpack.c.l.b16 %v1898
    %v1991 = vunpack.c.l.b16 %v1899
    %v1992 = vunpack.c.h.b16 %v1899
    %v1993 = vunpack.c.l.b16 %v1900
    %v1994 = vunpack.c.l.b16 %v1901
    %v1995 = vunpack.c.h.b16 %v1901
    %v1996 = vunpack.c.l.b16 %v1902
    %v1997 = vunpack.c.l.b16 %v1903
    %v1998 = vunpack.c.h.b16 %v1903
    %v1999 = vunpack.c.l.b16 %v1904
    %v2000 = vunpack.c.l.b16 %v1905
    %v2001 = vunpack.c.h.b16 %v1905
    %v2002 = vunpack.c.l.b16 %v1906
    %v2003 = vunpack.c.l.b16 %v1907
    %v2004 = vunpack.c.h.b16 %v1907
    %v2005 = vunpack.c.l.b16 %v1908
    %v2006 = vunpack.c.l.b16 %v1909
    %v2007 = vunpack.c.h.b16 %v1909
    %v2008 = vunpack.c.l.b16 %v1910
    %v2009 = vpack.c.b16 %v1964, %v1961
    %v2010 = vpack.c.b16 %v1965, %v1962
    %v2011 = vpack.c.b16 %v1966, %v1963
    %v2012 = vpack.c.b16 %v1970, %v1967
    %v2013 = vpack.c.b16 %v1971, %v1968
    %v2014 = vpack.c.b16 %v1972, %v1969
    %v2015 = vpack.c.b16 %v1976, %v1973
    %v2016 = vpack.c.b16 %v1977, %v1974
    %v2017 = vpack.c.b16 %v1978, %v1975
    %v2018 = vpack.c.b16 %v1982, %v1979
    %v2019 = vpack.c.b16 %v1983, %v1980
    %v2020 = vpack.c.b16 %v1984, %v1981
    %v2021 = vpack.c.b16 %v1988, %v1985
    %v2022 = vpack.c.b16 %v1989, %v1986
    %v2023 = vpack.c.b16 %v1990, %v1987
    %v2024 = vpack.c.b16 %v1994, %v1991
    %v2025 = vpack.c.b16 %v1995, %v1992
    %v2026 = vpack.c.b16 %v1996, %v1993
    %v2027 = vpack.c.b16 %v2000, %v1997
    %v2028 = vpack.c.b16 %v2001, %v1998
    %v2029 = vpack.c.b16 %v2002, %v1999
    %v2030 = vpack.c.b16 %v2006, %v2003
    %v2031 = vpack.c.b16 %v2007, %v2004
    %v2032 = vpack.c.b16 %v2008, %v2005
    %2057 = vmatprep.subr.bf16.mxu0 %v2010
    %2058 = vmatpush1.bf16.msra.mxu0 %v2009
    %2059 = vmatprep.subr.bf16.mxu0 %v2013
    %2060 = vmatpush1.bf16.msra.mxu0 %v2012
    %2061 = vmatprep.subr.bf16.mxu0 %v2016
    %2062 = vmatpush1.bf16.msra.mxu0 %v2015
    %2063 = vmatprep.subr.bf16.mxu0 %v2019
    %2064 = vmatpush1.bf16.msra.mxu0 %v2018
    %2065 = vmatprep.subr.bf16.mxu0 %v2022
    %2066 = vmatpush1.bf16.msra.mxu0 %v2021
    %2067 = vmatprep.subr.bf16.mxu0 %v2025
    %2068 = vmatpush1.bf16.msra.mxu0 %v2024
    %2069 = vmatprep.subr.bf16.mxu0 %v2028
    %2070 = vmatpush1.bf16.msra.mxu0 %v2027
    %2071 = vmatprep.subr.bf16.mxu0 %v2031
    %2072 = vmatpush1.bf16.msra.mxu0 %v2030
    %2073 = vmatprep.subr.bf16.mxu0 0
    %2074 = vmatpush1.bf16.msra.mxu0 0
    %2075 = vmatprep.subr.bf16.mxu0 0
    %2076 = vmatpush1.bf16.msra.mxu0 0
    %2077 = vmatprep.subr.bf16.mxu0 0
    %2078 = vmatpush1.bf16.msra.mxu0 0
    %2079 = vmatprep.subr.bf16.mxu0 0
    %2080 = vmatpush1.bf16.msra.mxu0 0
    %2081 = vmatprep.subr.bf16.mxu0 0
    %2082 = vmatpush1.bf16.msra.mxu0 0
    %2083 = vmatprep.subr.bf16.mxu0 0
    %2084 = vmatpush1.bf16.msra.mxu0 0
    %2085 = vmatprep.subr.bf16.mxu0 0
    %2086 = vmatpush1.bf16.msra.mxu0 0
    %2087 = vmatprep.subr.bf16.mxu0 0
    %2088 = vmatpush1.bf16.msra.mxu0 0
    %2089 = vmatprep.mubr.bf16.mxu0 0
    %2090 = vmatmul.mubr.bf16.gmra.mrb[0].mxu0 %v1878
    %v2091 = vpop.f32.mrb[0].mxu0
    %v2092 = vadd.f32 %v1917, %v2091
    %v2093 = vpop.f32.mrb[0].mxu0
    %v2094 = vadd.f32 %v1921, %v2093
    %v2095 = vpop.f32.mrb[0].mxu0
    %v2096 = vpop.f32.mrb[0].mxu0
    %2097 = vdwg.mxu0
    %2098 = vmatprep.subr.bf16.mxu0 0
    %2099 = vmatpush1.bf16.msra.mxu0 %v2011
    %2100 = vmatprep.subr.bf16.mxu0 0
    %2101 = vmatpush1.bf16.msra.mxu0 %v2014
    %2102 = vmatprep.subr.bf16.mxu0 0
    %2103 = vmatpush1.bf16.msra.mxu0 %v2017
    %2104 = vmatprep.subr.bf16.mxu0 0
    %2105 = vmatpush1.bf16.msra.mxu0 %v2020
    %2106 = vmatprep.subr.bf16.mxu0 0
    %2107 = vmatpush1.bf16.msra.mxu0 %v2023
    %2108 = vmatprep.subr.bf16.mxu0 0
    %2109 = vmatpush1.bf16.msra.mxu0 %v2026
    %2110 = vmatprep.subr.bf16.mxu0 0
    %2111 = vmatpush1.bf16.msra.mxu0 %v2029
    %2112 = vmatprep.subr.bf16.mxu0 0
    %2113 = vmatpush1.bf16.msra.mxu0 %v2032
    %2114 = vmatprep.subr.bf16.mxu0 0
    %2115 = vmatpush1.bf16.msra.mxu0 0
    %2116 = vmatprep.subr.bf16.mxu0 0
    %2117 = vmatpush1.bf16.msra.mxu0 0
    %2118 = vmatprep.subr.bf16.mxu0 0
    %2119 = vmatpush1.bf16.msra.mxu0 0
    %2120 = vmatprep.subr.bf16.mxu0 0
    %2121 = vmatpush1.bf16.msra.mxu0 0
    %2122 = vmatprep.subr.bf16.mxu0 0
    %2123 = vmatpush1.bf16.msra.mxu0 0
    %2124 = vmatprep.subr.bf16.mxu0 0
    %2125 = vmatpush1.bf16.msra.mxu0 0
    %2126 = vmatprep.subr.bf16.mxu0 0
    %2127 = vmatpush1.bf16.msra.mxu0 0
    %2128 = vmatprep.subr.bf16.mxu0 0
    %2129 = vmatpush1.bf16.msra.mxu0 0
    %2130 = vmatprep.mubr.bf16.mxu0 0
    %2131 = vmatmul.mubr.bf16.gmra.mrb[0].mxu0 %v1878
    %v2132 = vpop.f32.mrb[0].mxu0
    %v2133 = vadd.f32 %v1925, %v2132
    %v2134 = vpop.f32.mrb[0].mxu0
    %v2135 = vpop.f32.mrb[0].mxu0
    %v2136 = vpop.f32.mrb[0].mxu0
    %2137 = vdwg.mxu0
    %v2138 = vadd.f32 %v2092, %v638
    %v2139 = vadd.f32 %v2094, %v640
    %v2140 = vxor.u32 %v2138, 2147483648
    %v2141 = vxor.u32 %v2139, 2147483648
    %v2142 = vmul.f32 %v2140, 1.442695
    %v2143 = vpow.pop %v2142
    %v2144 = vmul.f32 %v2141, 1.442695
    %v2145 = vpow.pop %v2144
    %v2146 = vadd.f32 %v2143, 1.0
    %v2147 = vadd.f32 %v2145, 1.0
    %v2148 = vrcp.pop %v2146
    %v2149 = vmul.f32 1.0, %v2148
    %v2150 = vrcp.pop %v2147
    %v2151 = vmul.f32 1.0, %v2150
    %v2152 = vmul.f32 %v2149, %v679
    %v2153 = vadd.f32 %v2133, %v2152
    %v2154 = vtanh.pop %v2153
    %v2155 = vsub.f32 1.0, %v2151
    %v2156 = vmul.f32 %v2155, %v2154
    %v2157 = vmul.f32 %v2151, %v423
    %v2158 = vadd.f32 %v2156, %v2157
    %v2159 = vpack.c.bf16 %v2158, %v2158
    %v2160 = vld [vmem:[#allocation7 + $0x30] sm:$0xf]
    %v2161 = vld [vmem:[#allocation7 + $0x64] sm:$0xf]
    %v2162 = vld [vmem:[#allocation7 + $0x98] sm:$0xf]
    %v2163 = vld [vmem:[#allocation7 + $0xcc] sm:$0xf]
    %v2164 = vld [vmem:[#allocation7 + $0x100] sm:$0xf]
    %v2165 = vld [vmem:[#allocation7 + $0x134] sm:$0xf]
    %v2166 = vld [vmem:[#allocation7 + $0x168] sm:$0xf]
    %v2167 = vld [vmem:[#allocation7 + $0x19c] sm:$0xf]
    %v2168 = vld [vmem:[#allocation7 + $0x1d0] sm:$0xf]
    %v2169 = vld [vmem:[#allocation7 + $0x204] sm:$0xf]
    %v2170 = vld [vmem:[#allocation7 + $0x238] sm:$0xf]
    %v2171 = vld [vmem:[#allocation7 + $0x26c] sm:$0xf]
    %v2172 = vld [vmem:[#allocation7 + $0x2a0] sm:$0xf]
    %v2173 = vld [vmem:[#allocation7 + $0x2d4] sm:$0xf]
    %v2174 = vld [vmem:[#allocation7 + $0x308] sm:$0xf]
    %v2175 = vld [vmem:[#allocation7 + $0x33c] sm:$0xf]
    %v2192 = vunpack.c.l.b16 %v2160
    %v2193 = vunpack.c.l.b16 %v2161
    %v2194 = vunpack.c.l.b16 %v2162
    %v2195 = vunpack.c.l.b16 %v2163
    %v2196 = vunpack.c.l.b16 %v2164
    %v2197 = vunpack.c.l.b16 %v2165
    %v2198 = vunpack.c.l.b16 %v2166
    %v2199 = vunpack.c.l.b16 %v2167
    %v2200 = vunpack.c.l.b16 %v2168
    %v2201 = vunpack.c.l.b16 %v2169
    %v2202 = vunpack.c.l.b16 %v2170
    %v2203 = vunpack.c.l.b16 %v2171
    %v2204 = vunpack.c.l.b16 %v2172
    %v2205 = vunpack.c.l.b16 %v2173
    %v2206 = vunpack.c.l.b16 %v2174
    %v2207 = vunpack.c.l.b16 %v2175
    %v2208 = vpack.c.b16 %v2193, %v2192
    %v2209 = vpack.c.b16 %v2195, %v2194
    %v2210 = vpack.c.b16 %v2197, %v2196
    %v2211 = vpack.c.b16 %v2199, %v2198
    %v2212 = vpack.c.b16 %v2201, %v2200
    %v2213 = vpack.c.b16 %v2203, %v2202
    %v2214 = vpack.c.b16 %v2205, %v2204
    %v2215 = vpack.c.b16 %v2207, %v2206
    %2224 = vmatprep.subr.bf16.mxu0 0
    %2225 = vmatpush1.bf16.msra.mxu0 %v2208
    %2226 = vmatprep.subr.bf16.mxu0 0
    %2227 = vmatpush1.bf16.msra.mxu0 %v2209
    %2228 = vmatprep.subr.bf16.mxu0 0
    %2229 = vmatpush1.bf16.msra.mxu0 %v2210
    %2230 = vmatprep.subr.bf16.mxu0 0
    %2231 = vmatpush1.bf16.msra.mxu0 %v2211
    %2232 = vmatprep.subr.bf16.mxu0 0
    %2233 = vmatpush1.bf16.msra.mxu0 %v2212
    %2234 = vmatprep.subr.bf16.mxu0 0
    %2235 = vmatpush1.bf16.msra.mxu0 %v2213
    %2236 = vmatprep.subr.bf16.mxu0 0
    %2237 = vmatpush1.bf16.msra.mxu0 %v2214
    %2238 = vmatprep.subr.bf16.mxu0 0
    %2239 = vmatpush1.bf16.msra.mxu0 %v2215
    %2240 = vmatprep.subr.bf16.mxu0 0
    %2241 = vmatpush1.bf16.msra.mxu0 0
    %2242 = vmatprep.subr.bf16.mxu0 0
    %2243 = vmatpush1.bf16.msra.mxu0 0
    %2244 = vmatprep.subr.bf16.mxu0 0
    %2245 = vmatpush1.bf16.msra.mxu0 0
    %2246 = vmatprep.subr.bf16.mxu0 0
    %2247 = vmatpush1.bf16.msra.mxu0 0
    %2248 = vmatprep.subr.bf16.mxu0 0
    %2249 = vmatpush1.bf16.msra.mxu0 0
    %2250 = vmatprep.subr.bf16.mxu0 0
    %2251 = vmatpush1.bf16.msra.mxu0 0
    %2252 = vmatprep.subr.bf16.mxu0 0
    %2253 = vmatpush1.bf16.msra.mxu0 0
    %2254 = vmatprep.subr.bf16.mxu0 0
    %2255 = vmatpush1.bf16.msra.mxu0 0
    %2256 = vmatprep.mubr.bf16.mxu0 0
    %2257 = vmatmul.mubr.bf16.gmra.mrb[0].mxu0 %v2159
    %v2258 = vpop.f32.mrb[0].mxu0
    %v2259 = vadd.f32 0.0, %v2258
    %v2260 = vpop.f32.mrb[0].mxu0
    %v2261 = vpop.f32.mrb[0].mxu0
    %v2262 = vpop.f32.mrb[0].mxu0
    %2263 = vdwg.mxu0
    %v2264 = vld [vmem:[%s4 + $0x4] ss:$0 sm:$0xff]
    %v2265 = vadd.f32 %v2259, %v2264
    %v2266 = vld [vmem:[%s4 + $0x5] ss:$0 sm:$0xff]
    %v2267 = vpack.c.bf16 %v2266, %v2266
    %v2269 = vrot.slane %v1878, 1
    %2271 = vmatprep.subr.bf16.mxu0 0
    %2272 = vmatpush1.bf16.xpose.msra.mxu0 %v2269
    %2273 = vmatprep.subr.bf16.mxu0 0
    %2274 = vmatpush1.bf16.xpose.msra.mxu0 0
    %2275 = vmatprep.subr.bf16.mxu0 0
    %2276 = vmatpush1.bf16.xpose.msra.mxu0 0
    %2277 = vmatprep.subr.bf16.mxu0 0
    %2278 = vmatpush1.bf16.xpose.msra.mxu0 0
    %2279 = vmatprep.subr.bf16.mxu0 0
    %2280 = vmatpush1.bf16.xpose.msra.mxu0 0
    %2281 = vmatprep.subr.bf16.mxu0 0
    %2282 = vmatpush1.bf16.xpose.msra.mxu0 0
    %2283 = vmatprep.subr.bf16.mxu0 0
    %2284 = vmatpush1.bf16.xpose.msra.mxu0 0
    %2285 = vmatprep.subr.bf16.mxu0 0
    %2286 = vmatpush1.bf16.xpose.msra.mxu0 0
    %2287 = vmatprep.subr.bf16.mxu0 0
    %2288 = vmatpush1.bf16.xpose.msra.mxu0 0
    %2289 = vmatprep.subr.bf16.mxu0 0
    %2290 = vmatpush1.bf16.xpose.msra.mxu0 0
    %2291 = vmatprep.subr.bf16.mxu0 0
    %2292 = vmatpush1.bf16.xpose.msra.mxu0 0
    %2293 = vmatprep.subr.bf16.mxu0 0
    %2294 = vmatpush1.bf16.xpose.msra.mxu0 0
    %2295 = vmatprep.subr.bf16.mxu0 0
    %2296 = vmatpush1.bf16.xpose.msra.mxu0 0
    %2297 = vmatprep.subr.bf16.mxu0 0
    %2298 = vmatpush1.bf16.xpose.msra.mxu0 0
    %2299 = vmatprep.subr.bf16.mxu0 0
    %2300 = vmatpush1.bf16.xpose.msra.mxu0 0
    %2301 = vmatprep.subr.bf16.mxu0 0
    %2302 = vmatpush1.bf16.xpose.msra.mxu0 0
    %2303 = vmatprep.mubr.bf16.mxu0 0
    %2304 = vmatmul.mubr.bf16.gmra.mrb[0].mxu0 %v2267
    %v2305 = vpop.f32.mrb[0].mxu0
    %v2306 = vadd.f32 0.0, %v2305
    %v2307 = vpop.f32.mrb[0].mxu0
    %v2308 = vpop.f32.mrb[0].mxu0
    %v2309 = vpop.f32.mrb[0].mxu0
    %2310 = vdwg.mxu0
    %2312 = vset.pattern.permute.xlu0 0
    %2313 = vperm.xlu0 %2312, %v2259
    %v2314 = vpop.permute.xlu0 %2313
    %v2316 = vlaneseq
    %v2317 = vshrl.u32 %v2316, 7
    %v2318 = vsub.s32 0, %v2317
    %v2319 = vrot.slane %v2306, %v2318
    %v2320 = vadd.f32 %v2314, %v2319
    %2322 = vset.pattern.permute.xlu0 0
    %2323 = vperm.xlu0 %2322, %v2264
    %v2324 = vpop.permute.xlu0 %2323
    %v2326 = vadd.f32 %v2320, %v2324
    %v2327 = vmax.f32 %v2326, 0.0
    %2328 = vst [vmem:[#allocation8] sm:$0x3] %v2158
    %2330 = vrot.lane.b32.xlu0 %v2265, 31
    %v2331 = vpop.permute.xlu0 %2330
    %vm2333 = vcmask 263424
    %2334 = vst.msk [vmem:[#allocation8] sm:$0x3] %vm2333, %v2331
    %2336 = vrot.lane.b32.xlu0 %v2327, 64
    %v2337 = vpop.permute.xlu0 %2336
    %vm2339 = vcmask 550400
    %2340 = vst.msk [vmem:[#allocation8] sm:$0x3] %vm2339, %v2337
    // Predicated region
    $region34: #{tpu_custom_call.1} parent=1 // pred_check
      _
    $region35: #{tpu_custom_call.1} parent=1 // pred_check_branch
      %2342 = sbr.rel (0) target = $region37
    $region36: #{tpu_custom_call.1} parent=1 // pred_region
      %s2344 = ssub.s32 32, 32
      %2345 = vsyncadd [#allocation4], %s2344
      %s2347 = sshll.u32 [#allocation8], 4
      %s2348 = int_to_ptr.vmem [resolvable:$true] %s2347
      %2350 = dma.vmem_to_hbm [thread:$0]  %s2348, 32, %s5, [#allocation4]
    $region37: #{tpu_custom_call.1} parent=1 // pred_fallthru
      _
    // Predicated region
    $region38: #{tpu_custom_call.1} parent=1 // pred_check
      _
    $region39: #{tpu_custom_call.1} parent=1 // pred_check_branch
      %2352 = sbr.rel (0) target = $region41
    $region40: #{tpu_custom_call.1} parent=1 // pred_region
      %2353 = dma.done [#allocation4], 32
    $region41: #{tpu_custom_call.1} parent=1 // pred_fallthru
      _
    %2354 = vsyncpa [#allocation3], 1
    %2355 = vsyncpa [#allocation6], 1
    %2356 = vsyncpa [#allocation4], 1

</llo_original>
